<compile_context>
chip_gen: v7x
topology: tpu7x:2x2x1
jax: 0.10.0
libtpu: 0.0.40
codegen_flags: <defaults>
</compile_context>

<pallas_src>
import functools

import numpy as np
import jax
import jax.numpy as jnp
from jax import lax
from jax.experimental import pallas as pl
from jax.experimental.pallas import tpu as pltpu

NEG_SLOPE = 0.01   # nn.LeakyReLU default
BN_EPS = 1e-5      # nn.BatchNorm2d default


def _leaky(x):
    return jnp.where(x > 0, x, NEG_SLOPE * x)


# ---------------------------------------------------------------------------
# Kernel 1: fused conv1(1x1)+conv2(3x3) as a single im2col matmul per row
# tile, plus BN sum / sum-of-squares accumulation across the grid.
# Grid: row tiles of NHW.  The stats outputs are revisited -> "arbitrary".
# ---------------------------------------------------------------------------
def conv_stats_kernel(xc_ref, wc_ref, bc_ref,
                      resA_ref, sc_ref, ssum_ref, ssq_ref):
    cout = resA_ref.shape[-1]
    # One bf16 x bf16 -> f32 MXU matmul per tile (K = 9*Cin, N = 2*Cout).
    y = jnp.dot(xc_ref[...], wc_ref[...],
                preferred_element_type=jnp.float32) + bc_ref[...]
    y = _leaky(y)                       # LeakyReLU applies to both branches
    resA = y[:, :cout]                  # conv2 branch (pre-BN)
    resA_ref[...] = resA
    sc_ref[...] = y[:, cout:]           # conv1 shortcut branch

    # Per-channel partial sums for the BatchNorm batch statistics.
    s1 = jnp.sum(resA, axis=0, keepdims=True)
    s2 = jnp.sum(resA * resA, axis=0, keepdims=True)

    @pl.when(pl.program_id(0) == 0)
    def _init():
        ssum_ref[...] = s1
        ssq_ref[...] = s2

    @pl.when(pl.program_id(0) != 0)
    def _acc():
        ssum_ref[...] += s1
        ssq_ref[...] += s2


# ---------------------------------------------------------------------------
# Kernel 2: folded-BN FMA + residual add + separable AvgPool, per image.
# Lane-dense layout: rows = H, lanes = W*Cout (128 at the test shapes).
# ---------------------------------------------------------------------------
def bn_pool_kernel(resA_ref, sc_ref, scale_ref, bias_ref, ph_ref, pwc_ref,
                   out_ref, pool_ref):
    # resA1 = resA*scale + bias  (BN folded);  res = shortcut + resA1.
    res = sc_ref[...] + resA_ref[...] * scale_ref[...] + bias_ref[...]
    out_ref[...] = res
    # AvgPool2d(3, stride=2, padding=1, count_include_pad=True):
    #   rows via Ph (Ho,H) (carries the 1/9), cols via kron(Pw, I_C) on the
    #   flattened W*C lane axis.
    hp = jnp.dot(ph_ref[...], res, preferred_element_type=jnp.float32)
    pool_ref[...] = jnp.dot(hp, pwc_ref[...], preferred_element_type=jnp.float32)


def _pool_matrix(n_in, n_out):
    """P[o, i] = 1 if input index i is inside pooling window o (pad=1, s=2)."""
    P = np.zeros((n_out, n_in), np.float32)
    for o in range(n_out):
        for d in (-1, 0, 1):
            i = 2 * o + d
            if 0 <= i < n_in:
                P[o, i] = 1.0
    return P


def _pick_row_tile(nhw, cap):
    """Largest multiple-of-8 divisor of nhw that is <= cap (else nhw)."""
    best = nhw
    t = 8
    while t <= min(cap, nhw):
        if nhw % t == 0:
            best = t
        t += 8
    return best


@functools.partial(jax.jit, static_argnames=("row_tile",))
def resblock_forward(x_nchw, params, row_tile=None):
    N, Cin, H, W = x_nchw.shape
    Cout = params["conv1_w"].shape[0]
    Ho = (H + 2 - 3) // 2 + 1
    Wo = (W + 2 - 3) // 2 + 1
    NHW = N * H * W

    # Row-tile over NHW.  Re-derive per generation: ~512-1024 rows on
    # v5e/v6e (128 MiB VMEM), roughly half on v7x (64 MiB VMEM).
    if row_tile is None:
        row_tile = _pick_row_tile(NHW, cap=1024)
    if NHW % row_tile != 0:
        row_tile = NHW

    # ---- wrapper-side layout glue (fused by XLA into the HBM copies) ------
    x_nhwc = jnp.transpose(x_nchw, (0, 2, 3, 1)).astype(jnp.float32)
    x_pad = jnp.pad(x_nhwc, ((0, 0), (1, 1), (1, 1), (0, 0)))
    # im2col slab (NHW, 9*Cin); tap order (dy, dx, cin).
    patches = [x_pad[:, dy:dy + H, dx:dx + W, :]
               for dy in range(3) for dx in range(3)]
    x_im2col = jnp.concatenate(patches, axis=-1).reshape(NHW, 9 * Cin)
    x_im2col = x_im2col.astype(jnp.bfloat16)

    # Combined weight: columns [conv2 (all 9 taps) | conv1 (centre tap only)].
    w2 = jnp.transpose(params["conv2_w"], (2, 3, 1, 0)).reshape(9 * Cin, Cout)
    w1 = params["conv1_w"].reshape(Cout, Cin).T
    w1_full = jnp.zeros((9 * Cin, Cout), jnp.float32).at[4 * Cin:5 * Cin, :].set(w1)
    wc = jnp.concatenate([w2, w1_full], axis=1).astype(jnp.bfloat16)
    bc = jnp.concatenate([params["conv2_b"], params["conv1_b"]]
                         ).reshape(1, 2 * Cout).astype(jnp.float32)

    # ---- pass 1: conv matmul + BN statistics ------------------------------
    resA_pre, shortcut, ssum, ssq = pl.pallas_call(
        conv_stats_kernel,
        out_shape=(jax.ShapeDtypeStruct((NHW, Cout), jnp.float32),
                   jax.ShapeDtypeStruct((NHW, Cout), jnp.float32),
                   jax.ShapeDtypeStruct((1, Cout), jnp.float32),
                   jax.ShapeDtypeStruct((1, Cout), jnp.float32)),
        grid_spec=pltpu.PrefetchScalarGridSpec(
            num_scalar_prefetch=0,
            grid=(NHW // row_tile,),
            in_specs=[pl.BlockSpec((row_tile, 9 * Cin), lambda i: (i, 0)),
                      pl.BlockSpec((9 * Cin, 2 * Cout), lambda i: (0, 0)),
                      pl.BlockSpec((1, 2 * Cout), lambda i: (0, 0))],
            out_specs=(pl.BlockSpec((row_tile, Cout), lambda i: (i, 0)),
                       pl.BlockSpec((row_tile, Cout), lambda i: (i, 0)),
                       pl.BlockSpec((1, Cout), lambda i: (0, 0)),
                       pl.BlockSpec((1, Cout), lambda i: (0, 0)))),
        compiler_params=pltpu.CompilerParams(
            dimension_semantics=("arbitrary",),
            vmem_limit_bytes=32 * 1024 * 1024),
    )(x_im2col, wc, bc)

    # ---- fold BN (training-mode batch stats) into one scale/bias (O(C)) ---
    inv_n = 1.0 / float(NHW)
    mean = ssum[0] * inv_n
    var = ssq[0] * inv_n - mean * mean
    scale = params["bn1_w"] * lax.rsqrt(var + BN_EPS)
    bias = params["bn1_b"] - mean * scale
    scale_t = jnp.tile(scale, (W,)).reshape(1, W * Cout)   # lane = w*Cout + c
    bias_t = jnp.tile(bias, (W,)).reshape(1, W * Cout)

    # Lane-dense layout for the epilogue (pure row-major metadata reshape).
    resA2 = resA_pre.reshape(N * H, W * Cout)
    sc2 = shortcut.reshape(N * H, W * Cout)

    # Separable pooling operators (count_include_pad=True -> constant /9).
    ph = jnp.asarray(_pool_matrix(H, Ho) / 9.0)                      # (Ho, H)
    pwc = jnp.asarray(np.kron(_pool_matrix(W, Wo).T,
                              np.eye(Cout, dtype=np.float32)))       # (W*C, Wo*C)

    # TODO(synk): nn.Dropout2d is stochastic in train mode; identity (eval) here.
    # ---- pass 2: BN FMA + residual add + pooling (per image, parallel) ----
    resA_out, pool_out = pl.pallas_call(
        bn_pool_kernel,
        out_shape=(jax.ShapeDtypeStruct((N * H, W * Cout), jnp.float32),
                   jax.ShapeDtypeStruct((N * Ho, Wo * Cout), jnp.float32)),
        grid_spec=pltpu.PrefetchScalarGridSpec(
            num_scalar_prefetch=0,
            grid=(N,),
            in_specs=[pl.BlockSpec((H, W * Cout), lambda n: (n, 0)),
                      pl.BlockSpec((H, W * Cout), lambda n: (n, 0)),
                      pl.BlockSpec((1, W * Cout), lambda n: (0, 0)),
                      pl.BlockSpec((1, W * Cout), lambda n: (0, 0)),
                      pl.BlockSpec((Ho, H), lambda n: (0, 0)),
                      pl.BlockSpec((W * Cout, Wo * Cout), lambda n: (0, 0))],
            out_specs=(pl.BlockSpec((H, W * Cout), lambda n: (n, 0)),
                       pl.BlockSpec((Ho, Wo * Cout), lambda n: (n, 0)))),
        compiler_params=pltpu.CompilerParams(
            dimension_semantics=("parallel",),
            vmem_limit_bytes=32 * 1024 * 1024),
    )(resA2, sc2, scale_t, bias_t, ph, pwc)

    resA_nchw = jnp.transpose(resA_out.reshape(N, H, W, Cout), (0, 3, 1, 2))
    pool_nchw = jnp.transpose(pool_out.reshape(N, Ho, Wo, Cout), (0, 3, 1, 2))
    return pool_nchw, resA_nchw


def resblock_reference(x, params):
    dn = ("NCHW", "OIHW", "NCHW")
    shortcut = lax.conv_general_dilated(x, params["conv1_w"], (1, 1), "VALID",
                                        dimension_numbers=dn)
    shortcut = shortcut + params["conv1_b"][None, :, None, None]
    shortcut = jnp.where(shortcut > 0, shortcut, NEG_SLOPE * shortcut)

    resA = lax.conv_general_dilated(x, params["conv2_w"], (1, 1),
                                    ((1, 1), (1, 1)), dimension_numbers=dn)
    resA = resA + params["conv2_b"][None, :, None, None]
    resA = jnp.where(resA > 0, resA, NEG_SLOPE * resA)

    mean = resA.mean(axis=(0, 2, 3), keepdims=True)
    var = ((resA - mean) ** 2).mean(axis=(0, 2, 3), keepdims=True)
    resA1 = (resA - mean) / jnp.sqrt(var + BN_EPS)
    resA1 = resA1 * params["bn1_w"][None, :, None, None] + params["bn1_b"][None, :, None, None]

    resA = shortcut + resA1
    pooled = lax.reduce_window(resA, 0.0, lax.add, (1, 1, 3, 3), (1, 1, 2, 2),
                               ((0, 0), (0, 0), (1, 1), (1, 1))) / 9.0
    return pooled, resA


if __name__ == "__main__":
    key = jax.random.PRNGKey(0)
    N, Cin, Cout, H, W = 2, 4, 8, 16, 16
    ks = jax.random.split(key, 7)
    x = jax.random.normal(ks[0], (N, Cin, H, W), jnp.float32)
    params = {
        "conv1_w": 0.1 * jax.random.normal(ks[1], (Cout, Cin, 1, 1), jnp.float32),
        "conv1_b": 0.1 * jax.random.normal(ks[2], (Cout,), jnp.float32),
        "conv2_w": 0.1 * jax.random.normal(ks[3], (Cout, Cin, 3, 3), jnp.float32),
        "conv2_b": 0.1 * jax.random.normal(ks[4], (Cout,), jnp.float32),
        "bn1_w": 1.0 + 0.1 * jax.random.normal(ks[5], (Cout,), jnp.float32),
        "bn1_b": 0.1 * jax.random.normal(ks[6], (Cout,), jnp.float32),
    }

    # row_tile=256 -> a 2-step grid at this toy size so the cross-tile BN
    # accumulation path is actually exercised.
    resB, resA = jax.block_until_ready(resblock_forward(x, params, row_tile=256))
    refB, refA = resblock_reference(x, params)
    np.testing.assert_allclose(np.asarray(resA), np.asarray(refA), rtol=2e-2, atol=2e-2)
    np.testing.assert_allclose(np.asarray(resB), np.asarray(refB), rtol=2e-2, atol=2e-2)
    print("KERNEL_OK")
</pallas_src>

<mosaic_0001>
module attributes {stable_mosaic.version = 11 : i64} {
  func.func @conv_stats_kernel(%arg0: i32, %arg1: memref<256x36xbf16, #tpu.memory_space<vmem>>, %arg2: memref<36x16xbf16, #tpu.memory_space<vmem>>, %arg3: memref<1x16xf32, #tpu.memory_space<vmem>>, %arg4: memref<256x8xf32, #tpu.memory_space<vmem>>, %arg5: memref<256x8xf32, #tpu.memory_space<vmem>>, %arg6: memref<1x8xf32, #tpu.memory_space<vmem>>, %arg7: memref<1x8xf32, #tpu.memory_space<vmem>>) attributes {dimension_semantics = [#tpu.dimension_semantics<arbitrary>], iteration_bounds = array<i64: 2>, scalar_prefetch = 0 : i64, scratch_operands = 0 : i64, tpu.core_type = #tpu.core_type<tc>, window_params = [{transform_indices = @transform_0, window_bounds = array<i64: 256, 36>}, {pipeline_mode = #tpu.pipeline_mode<synchronous>, transform_indices = @transform_1, window_bounds = array<i64: 36, 16>}, {pipeline_mode = #tpu.pipeline_mode<synchronous>, transform_indices = @transform_2, window_bounds = array<i64: 1, 16>}, {transform_indices = @transform_3, window_bounds = array<i64: 256, 8>}, {transform_indices = @transform_4, window_bounds = array<i64: 256, 8>}, {pipeline_mode = #tpu.pipeline_mode<synchronous>, transform_indices = @transform_5, window_bounds = array<i64: 1, 8>}, {pipeline_mode = #tpu.pipeline_mode<synchronous>, transform_indices = @transform_6, window_bounds = array<i64: 1, 8>}]} {
    %c0 = arith.constant 0 : index
    %c0_0 = arith.constant 0 : index
    %0 = vector.load %arg1[%c0, %c0_0] : memref<256x36xbf16, #tpu.memory_space<vmem>>, vector<256x36xbf16>
    %c0_1 = arith.constant 0 : index
    %c0_2 = arith.constant 0 : index
    %1 = vector.load %arg2[%c0_1, %c0_2] : memref<36x16xbf16, #tpu.memory_space<vmem>>, vector<36x16xbf16>
    %cst = arith.constant dense<0.000000e+00> : vector<256x16xf32>
    %2 = tpu.matmul %0, %1, %cst {dimension_numbers = #tpu.dot_dimension_numbers<[1], [0], [0], [1], [0, 0, 1, 1], [], []>} : vector<256x36xbf16>, vector<36x16xbf16>, vector<256x16xf32> -> vector<256x16xf32>
    %c0_3 = arith.constant 0 : index
    %c0_4 = arith.constant 0 : index
    %3 = vector.load %arg3[%c0_3, %c0_4] : memref<1x16xf32, #tpu.memory_space<vmem>>, vector<1x16xf32>
    %4 = vector.broadcast %3 : vector<1x16xf32> to vector<256x16xf32>
    %5 = arith.addf %2, %4 : vector<256x16xf32>
    %cst_5 = arith.constant 0.000000e+00 : f32
    %6 = vector.broadcast %cst_5 : f32 to vector<256x16xf32>
    %7 = arith.cmpf ogt, %5, %6 : vector<256x16xf32>
    %cst_6 = arith.constant 0.00999999977 : f32
    %8 = vector.broadcast %cst_6 : f32 to vector<256x16xf32>
    %9 = arith.mulf %8, %5 : vector<256x16xf32>
    %10 = arith.select %7, %5, %9 : vector<256x16xi1>, vector<256x16xf32>
    %11 = vector.extract_strided_slice %10 {offsets = [0, 0], sizes = [256, 8], strides = [1, 1]} : vector<256x16xf32> to vector<256x8xf32>
    %c0_7 = arith.constant 0 : index
    %c0_8 = arith.constant 0 : index
    %12 = vector.load %arg4[%c0_7, %c0_8] : memref<256x8xf32, #tpu.memory_space<vmem>>, vector<256x8xf32>
    tpu.vector_store %arg4[%c0_7, %c0_8], %11 {strides = array<i32>} : memref<256x8xf32, #tpu.memory_space<vmem>>, vector<256x8xf32>,
    %13 = vector.extract_strided_slice %10 {offsets = [0, 8], sizes = [256, 8], strides = [1, 1]} : vector<256x16xf32> to vector<256x8xf32>
    %c0_9 = arith.constant 0 : index
    %c0_10 = arith.constant 0 : index
    %14 = vector.load %arg5[%c0_9, %c0_10] : memref<256x8xf32, #tpu.memory_space<vmem>>, vector<256x8xf32>
    tpu.vector_store %arg5[%c0_9, %c0_10], %13 {strides = array<i32>} : memref<256x8xf32, #tpu.memory_space<vmem>>, vector<256x8xf32>,
    %cst_11 = arith.constant dense<0.000000e+00> : vector<8xf32>
    %15 = vector.multi_reduction <add>, %11, %cst_11 [0] : vector<256x8xf32> to vector<8xf32>
    %16 = vector.shape_cast %15 : vector<8xf32> to vector<1x8xf32>
    %17 = arith.mulf %11, %11 : vector<256x8xf32>
    %cst_12 = arith.constant dense<0.000000e+00> : vector<8xf32>
    %18 = vector.multi_reduction <add>, %17, %cst_12 [0] : vector<256x8xf32> to vector<8xf32>
    %19 = vector.shape_cast %18 : vector<8xf32> to vector<1x8xf32>
    %c0_i32 = arith.constant 0 : i32
    %20 = arith.cmpi eq, %arg0, %c0_i32 : i32
    %21 = arith.extui %20 : i1 to i32
    %c0_i32_13 = arith.constant 0 : i32
    %22 = arith.cmpi ne, %21, %c0_i32_13 : i32
    scf.if %22 {
      %c0_16 = arith.constant 0 : index
      %c0_17 = arith.constant 0 : index
      %26 = vector.load %arg6[%c0_16, %c0_17] : memref<1x8xf32, #tpu.memory_space<vmem>>, vector<1x8xf32>
      tpu.vector_store %arg6[%c0_16, %c0_17], %16 {strides = array<i32>} : memref<1x8xf32, #tpu.memory_space<vmem>>, vector<1x8xf32>,
      %c0_18 = arith.constant 0 : index
      %c0_19 = arith.constant 0 : index
      %27 = vector.load %arg7[%c0_18, %c0_19] : memref<1x8xf32, #tpu.memory_space<vmem>>, vector<1x8xf32>
      tpu.vector_store %arg7[%c0_18, %c0_19], %19 {strides = array<i32>} : memref<1x8xf32, #tpu.memory_space<vmem>>, vector<1x8xf32>,
    } else {
    }
    %c0_i32_14 = arith.constant 0 : i32
    %23 = arith.cmpi ne, %arg0, %c0_i32_14 : i32
    %24 = arith.extui %23 : i1 to i32
    %c0_i32_15 = arith.constant 0 : i32
    %25 = arith.cmpi ne, %24, %c0_i32_15 : i32
    scf.if %25 {
      %c0_16 = arith.constant 0 : index
      %c0_17 = arith.constant 0 : index
      %26 = vector.load %arg6[%c0_16, %c0_17] : memref<1x8xf32, #tpu.memory_space<vmem>>, vector<1x8xf32>
      %27 = arith.addf %26, %16 : vector<1x8xf32>
      %c0_18 = arith.constant 0 : index
      %c0_19 = arith.constant 0 : index
      %28 = vector.load %arg6[%c0_18, %c0_19] : memref<1x8xf32, #tpu.memory_space<vmem>>, vector<1x8xf32>
      tpu.vector_store %arg6[%c0_18, %c0_19], %27 {strides = array<i32>} : memref<1x8xf32, #tpu.memory_space<vmem>>, vector<1x8xf32>,
      %c0_20 = arith.constant 0 : index
      %c0_21 = arith.constant 0 : index
      %29 = vector.load %arg7[%c0_20, %c0_21] : memref<1x8xf32, #tpu.memory_space<vmem>>, vector<1x8xf32>
      %30 = arith.addf %29, %19 : vector<1x8xf32>
      %c0_22 = arith.constant 0 : index
      %c0_23 = arith.constant 0 : index
      %31 = vector.load %arg7[%c0_22, %c0_23] : memref<1x8xf32, #tpu.memory_space<vmem>>, vector<1x8xf32>
      tpu.vector_store %arg7[%c0_22, %c0_23], %30 {strides = array<i32>} : memref<1x8xf32, #tpu.memory_space<vmem>>, vector<1x8xf32>,
    } else {
    }
    return
  }
  func.func @transform_0(%arg0: i32) -> (i32, i32) {
    %c0_i32 = arith.constant 0 : i32
    %c0_i32_0 = arith.constant 0 : i32
    return %arg0, %c0_i32 : i32, i32
  }
  func.func @transform_1(%arg0: i32) -> (i32, i32) {
    %c0_i32 = arith.constant 0 : i32
    %c0_i32_0 = arith.constant 0 : i32
    %c0_i32_1 = arith.constant 0 : i32
    return %c0_i32, %c0_i32_0 : i32, i32
  }
  func.func @transform_2(%arg0: i32) -> (i32, i32) {
    %c0_i32 = arith.constant 0 : i32
    %c0_i32_0 = arith.constant 0 : i32
    %c0_i32_1 = arith.constant 0 : i32
    return %c0_i32, %c0_i32_0 : i32, i32
  }
  func.func @transform_3(%arg0: i32) -> (i32, i32) {
    %c0_i32 = arith.constant 0 : i32
    %c0_i32_0 = arith.constant 0 : i32
    return %arg0, %c0_i32 : i32, i32
  }
  func.func @transform_4(%arg0: i32) -> (i32, i32) {
    %c0_i32 = arith.constant 0 : i32
    %c0_i32_0 = arith.constant 0 : i32
    return %arg0, %c0_i32 : i32, i32
  }
  func.func @transform_5(%arg0: i32) -> (i32, i32) {
    %c0_i32 = arith.constant 0 : i32
    %c0_i32_0 = arith.constant 0 : i32
    %c0_i32_1 = arith.constant 0 : i32
    return %c0_i32, %c0_i32_0 : i32, i32
  }
  func.func @transform_6(%arg0: i32) -> (i32, i32) {
    %c0_i32 = arith.constant 0 : i32
    %c0_i32_0 = arith.constant 0 : i32
    %c0_i32_1 = arith.constant 0 : i32
    return %c0_i32, %c0_i32_0 : i32, i32
  }
}

module attributes {stable_mosaic.version = 11 : i64} {
  func.func @bn_pool_kernel(%arg0: i32, %arg1: memref<16x128xf32, #tpu.memory_space<vmem>>, %arg2: memref<16x128xf32, #tpu.memory_space<vmem>>, %arg3: memref<1x128xf32, #tpu.memory_space<vmem>>, %arg4: memref<1x128xf32, #tpu.memory_space<vmem>>, %arg5: memref<8x16xf32, #tpu.memory_space<vmem>>, %arg6: memref<128x64xf32, #tpu.memory_space<vmem>>, %arg7: memref<16x128xf32, #tpu.memory_space<vmem>>, %arg8: memref<8x64xf32, #tpu.memory_space<vmem>>) attributes {dimension_semantics = [#tpu.dimension_semantics<parallel>], iteration_bounds = array<i64: 2>, scalar_prefetch = 0 : i64, scratch_operands = 0 : i64, tpu.core_type = #tpu.core_type<tc>, window_params = [{transform_indices = @transform_0, window_bounds = array<i64: 16, 128>}, {transform_indices = @transform_1, window_bounds = array<i64: 16, 128>}, {pipeline_mode = #tpu.pipeline_mode<synchronous>, transform_indices = @transform_2, window_bounds = array<i64: 1, 128>}, {pipeline_mode = #tpu.pipeline_mode<synchronous>, transform_indices = @transform_3, window_bounds = array<i64: 1, 128>}, {pipeline_mode = #tpu.pipeline_mode<synchronous>, transform_indices = @transform_4, window_bounds = array<i64: 8, 16>}, {pipeline_mode = #tpu.pipeline_mode<synchronous>, transform_indices = @transform_5, window_bounds = array<i64: 128, 64>}, {transform_indices = @transform_6, window_bounds = array<i64: 16, 128>}, {transform_indices = @transform_7, window_bounds = array<i64: 8, 64>}]} {
    %c0 = arith.constant 0 : index
    %c0_0 = arith.constant 0 : index
    %0 = vector.load %arg2[%c0, %c0_0] : memref<16x128xf32, #tpu.memory_space<vmem>>, vector<16x128xf32>
    %c0_1 = arith.constant 0 : index
    %c0_2 = arith.constant 0 : index
    %1 = vector.load %arg1[%c0_1, %c0_2] : memref<16x128xf32, #tpu.memory_space<vmem>>, vector<16x128xf32>
    %c0_3 = arith.constant 0 : index
    %c0_4 = arith.constant 0 : index
    %2 = vector.load %arg3[%c0_3, %c0_4] : memref<1x128xf32, #tpu.memory_space<vmem>>, vector<1x128xf32>
    %3 = vector.broadcast %2 : vector<1x128xf32> to vector<16x128xf32>
    %4 = arith.mulf %1, %3 : vector<16x128xf32>
    %5 = arith.addf %0, %4 : vector<16x128xf32>
    %c0_5 = arith.constant 0 : index
    %c0_6 = arith.constant 0 : index
    %6 = vector.load %arg4[%c0_5, %c0_6] : memref<1x128xf32, #tpu.memory_space<vmem>>, vector<1x128xf32>
    %7 = vector.broadcast %6 : vector<1x128xf32> to vector<16x128xf32>
    %8 = arith.addf %5, %7 : vector<16x128xf32>
    %c0_7 = arith.constant 0 : index
    %c0_8 = arith.constant 0 : index
    %9 = vector.load %arg7[%c0_7, %c0_8] : memref<16x128xf32, #tpu.memory_space<vmem>>, vector<16x128xf32>
    tpu.vector_store %arg7[%c0_7, %c0_8], %8 {strides = array<i32>} : memref<16x128xf32, #tpu.memory_space<vmem>>, vector<16x128xf32>,
    %c0_9 = arith.constant 0 : index
    %c0_10 = arith.constant 0 : index
    %10 = vector.load %arg5[%c0_9, %c0_10] : memref<8x16xf32, #tpu.memory_space<vmem>>, vector<8x16xf32>
    %cst = arith.constant dense<0.000000e+00> : vector<8x128xf32>
    %11 = tpu.matmul %10, %8, %cst {dimension_numbers = #tpu.dot_dimension_numbers<[1], [0], [0], [1], [0, 0, 1, 1], [], []>} : vector<8x16xf32>, vector<16x128xf32>, vector<8x128xf32> -> vector<8x128xf32>
    %c0_11 = arith.constant 0 : index
    %c0_12 = arith.constant 0 : index
    %12 = vector.load %arg6[%c0_11, %c0_12] : memref<128x64xf32, #tpu.memory_space<vmem>>, vector<128x64xf32>
    %cst_13 = arith.constant dense<0.000000e+00> : vector<8x64xf32>
    %13 = tpu.matmul %11, %12, %cst_13 {dimension_numbers = #tpu.dot_dimension_numbers<[1], [0], [0], [1], [0, 0, 1, 1], [], []>} : vector<8x128xf32>, vector<128x64xf32>, vector<8x64xf32> -> vector<8x64xf32>
    %c0_14 = arith.constant 0 : index
    %c0_15 = arith.constant 0 : index
    %14 = vector.load %arg8[%c0_14, %c0_15] : memref<8x64xf32, #tpu.memory_space<vmem>>, vector<8x64xf32>
    tpu.vector_store %arg8[%c0_14, %c0_15], %13 {strides = array<i32>} : memref<8x64xf32, #tpu.memory_space<vmem>>, vector<8x64xf32>,
    return
  }
  func.func @transform_0(%arg0: i32) -> (i32, i32) {
    %c0_i32 = arith.constant 0 : i32
    %c0_i32_0 = arith.constant 0 : i32
    return %arg0, %c0_i32 : i32, i32
  }
  func.func @transform_1(%arg0: i32) -> (i32, i32) {
    %c0_i32 = arith.constant 0 : i32
    %c0_i32_0 = arith.constant 0 : i32
    return %arg0, %c0_i32 : i32, i32
  }
  func.func @transform_2(%arg0: i32) -> (i32, i32) {
    %c0_i32 = arith.constant 0 : i32
    %c0_i32_0 = arith.constant 0 : i32
    %c0_i32_1 = arith.constant 0 : i32
    return %c0_i32, %c0_i32_0 : i32, i32
  }
  func.func @transform_3(%arg0: i32) -> (i32, i32) {
    %c0_i32 = arith.constant 0 : i32
    %c0_i32_0 = arith.constant 0 : i32
    %c0_i32_1 = arith.constant 0 : i32
    return %c0_i32, %c0_i32_0 : i32, i32
  }
  func.func @transform_4(%arg0: i32) -> (i32, i32) {
    %c0_i32 = arith.constant 0 : i32
    %c0_i32_0 = arith.constant 0 : i32
    %c0_i32_1 = arith.constant 0 : i32
    return %c0_i32, %c0_i32_0 : i32, i32
  }
  func.func @transform_5(%arg0: i32) -> (i32, i32) {
    %c0_i32 = arith.constant 0 : i32
    %c0_i32_0 = arith.constant 0 : i32
    %c0_i32_1 = arith.constant 0 : i32
    return %c0_i32, %c0_i32_0 : i32, i32
  }
  func.func @transform_6(%arg0: i32) -> (i32, i32) {
    %c0_i32 = arith.constant 0 : i32
    %c0_i32_0 = arith.constant 0 : i32
    return %arg0, %c0_i32 : i32, i32
  }
  func.func @transform_7(%arg0: i32) -> (i32, i32) {
    %c0_i32 = arith.constant 0 : i32
    %c0_i32_0 = arith.constant 0 : i32
    return %arg0, %c0_i32 : i32, i32
  }
}

</mosaic_0001>

<llo_original>
// kernel: tile.13
$region0: #{tile.13}
  #allocation0 [shape = 's32[1]{0}', space=sflag, size = 0x4, scoped, tag = 'scoped memory for tile.13']
  %s0 = inlined_call_operand.vmem [shape: f32[8], index: 0, kind: input, shape index: {}]
  %s1 = inlined_call_operand.vmem [shape: f32[16,8], index: 1, kind: output, shape index: {}]
  // Predicated region
  $region2: #{tile.13} parent=0 // pred_check
    _
  $region3: #{tile.13} parent=0 // pred_check_branch
    %3 = sbr.rel (0) target = $region5
  $region4: #{tile.13} parent=0 // pred_region
    _
  $region5: #{tile.13} parent=0 // pred_fallthru
    _
  %v4 = vld [vmem:[%s0] ss:$0 sm:$0xff]
  %5 = vst [vmem:[%s1] sm:$0xff] %v4
  %s6 = scalar_lea.vmem %s1, 8
  %7 = vst [vmem:[%s6] sm:$0xff] %v4

// kernel: tile.14
$region0: #{tile.14}
  %s0 = inlined_call_operand.vmem [shape: f32[16,8], index: 0, kind: input, shape index: {}]
  %s1 = inlined_call_operand.vmem [shape: f32[1,128], index: 1, kind: output, shape index: {}]
  $region1: #{tile.14} parent=0
    #allocation0 [shape = 'u8[4096]{0}', space=vmem, size = 0x1000, scoped, tag = 'scoped mem for output reshape']
    %v2 = vld [vmem:[%s0] sm:$0x1]
    %vm3 = vcmask 64512
    %4 = vst.msk [vmem:[#allocation0] sm:$0x1] %vm3, %v2
    %s5 = scalar_lea.vmem %s0, 15
    %v6 = vld [vmem:[%s5] sm:$0x1]
    %7 = vrot.lane.b32.xlu0 %v6, 120
    %v8 = vpop.permute.xlu0 %7
    %vm9 = vcmask 1048512
    %10 = vst.msk [vmem:[#allocation0] sm:$0x1] %vm9, %v8
    %s11 = scalar_lea.vmem %s0, 14
    %v12 = vld [vmem:[%s11] sm:$0x1]
    %13 = vrot.lane.b32.xlu0 %v12, 112
    %v14 = vpop.permute.xlu0 %13
    %vm15 = vcmask 982912
    %16 = vst.msk [vmem:[#allocation0] sm:$0x1] %vm15, %v14
    %s17 = scalar_lea.vmem %s0, 13
    %v18 = vld [vmem:[%s17] sm:$0x1]
    %19 = vrot.lane.b32.xlu0 %v18, 104
    %v20 = vpop.permute.xlu0 %19
    %vm21 = vcmask 917312
    %22 = vst.msk [vmem:[#allocation0] sm:$0x1] %vm21, %v20
    %s23 = scalar_lea.vmem %s0, 12
    %v24 = vld [vmem:[%s23] sm:$0x1]
    %25 = vrot.lane.b32.xlu0 %v24, 96
    %v26 = vpop.permute.xlu0 %25
    %vm27 = vcmask 851712
    %28 = vst.msk [vmem:[#allocation0] sm:$0x1] %vm27, %v26
    %s29 = scalar_lea.vmem %s0, 11
    %v30 = vld [vmem:[%s29] sm:$0x1]
    %31 = vrot.lane.b32.xlu0 %v30, 88
    %v32 = vpop.permute.xlu0 %31
    %vm33 = vcmask 786112
    %34 = vst.msk [vmem:[#allocation0] sm:$0x1] %vm33, %v32
    %s35 = scalar_lea.vmem %s0, 10
    %v36 = vld [vmem:[%s35] sm:$0x1]
    %37 = vrot.lane.b32.xlu0 %v36, 80
    %v38 = vpop.permute.xlu0 %37
    %vm39 = vcmask 720512
    %40 = vst.msk [vmem:[#allocation0] sm:$0x1] %vm39, %v38
    %s41 = scalar_lea.vmem %s0, 9
    %v42 = vld [vmem:[%s41] sm:$0x1]
    %43 = vrot.lane.b32.xlu0 %v42, 72
    %v44 = vpop.permute.xlu0 %43
    %vm45 = vcmask 654912
    %46 = vst.msk [vmem:[#allocation0] sm:$0x1] %vm45, %v44
    %s47 = scalar_lea.vmem %s0, 8
    %v48 = vld [vmem:[%s47] sm:$0x1]
    %49 = vrot.lane.b32.xlu0 %v48, 64
    %v50 = vpop.permute.xlu0 %49
    %vm51 = vcmask 589312
    %52 = vst.msk [vmem:[#allocation0] sm:$0x1] %vm51, %v50
    %s53 = scalar_lea.vmem %s0, 7
    %v54 = vld [vmem:[%s53] sm:$0x1]
    %55 = vrot.lane.b32.xlu0 %v54, 56
    %v56 = vpop.permute.xlu0 %55
    %vm57 = vcmask 523712
    %58 = vst.msk [vmem:[#allocation0] sm:$0x1] %vm57, %v56
    %s59 = scalar_lea.vmem %s0, 6
    %v60 = vld [vmem:[%s59] sm:$0x1]
    %61 = vrot.lane.b32.xlu0 %v60, 48
    %v62 = vpop.permute.xlu0 %61
    %vm63 = vcmask 458112
    %64 = vst.msk [vmem:[#allocation0] sm:$0x1] %vm63, %v62
    %s65 = scalar_lea.vmem %s0, 5
    %v66 = vld [vmem:[%s65] sm:$0x1]
    %67 = vrot.lane.b32.xlu0 %v66, 40
    %v68 = vpop.permute.xlu0 %67
    %vm69 = vcmask 392512
    %70 = vst.msk [vmem:[#allocation0] sm:$0x1] %vm69, %v68
    %s71 = scalar_lea.vmem %s0, 4
    %v72 = vld [vmem:[%s71] sm:$0x1]
    %73 = vrot.lane.b32.xlu0 %v72, 32
    %v74 = vpop.permute.xlu0 %73
    %vm75 = vcmask 326912
    %76 = vst.msk [vmem:[#allocation0] sm:$0x1] %vm75, %v74
    %s77 = scalar_lea.vmem %s0, 3
    %v78 = vld [vmem:[%s77] sm:$0x1]
    %79 = vrot.lane.b32.xlu0 %v78, 24
    %v80 = vpop.permute.xlu0 %79
    %vm81 = vcmask 261312
    %82 = vst.msk [vmem:[#allocation0] sm:$0x1] %vm81, %v80
    %s83 = scalar_lea.vmem %s0, 2
    %v84 = vld [vmem:[%s83] sm:$0x1]
    %85 = vrot.lane.b32.xlu0 %v84, 16
    %v86 = vpop.permute.xlu0 %85
    %vm87 = vcmask 195712
    %88 = vst.msk [vmem:[#allocation0] sm:$0x1] %vm87, %v86
    %s89 = scalar_lea.vmem %s0, 1
    %v90 = vld [vmem:[%s89] sm:$0x1]
    %91 = vrot.lane.b32.xlu0 %v90, 8
    %v92 = vpop.permute.xlu0 %91
    %vm93 = vcmask 130112
    %94 = vst.msk [vmem:[#allocation0] sm:$0x1] %vm93, %v92
    %s96 = sshllo.u32 0, 1
    %v98 = vld [vmem:[#allocation0] sm:%s96]
    %s99 = sshllo.u32 0, 1
    %100 = vst [vmem:[%s1] sm:%s99] %v98

// kernel: resblock_forward.3
$region0: #{resblock_forward.3}
  #allocation0 [shape = 'u32[]', space=smem, size = 0x4, offset = 0x4, fixed_abs, tag = 'smem constant byte address 0x4 - core index']
  #allocation1 [shape = 'u32[144,128]{1,0:T(1,128)}', space=vmem, size = 0x12000, scoped, tag = 'internal scratch']
  %s0 = inlined_call_operand.vmem [shape: f32[32,128], index: 0, kind: input, shape index: {}]
  %s1 = inlined_call_operand.vmem [shape: f32[32,128], index: 1, kind: input, shape index: {}]
  %s2 = inlined_call_operand.vmem [shape: f32[1,128], index: 2, kind: input, shape index: {}]
  %s3 = inlined_call_operand.vmem [shape: f32[1,128], index: 3, kind: input, shape index: {}]
  %s4 = inlined_call_operand.vmem [shape: f32[8,16], index: 4, kind: input, shape index: {}]
  %s5 = inlined_call_operand.vmem [shape: f32[128,64], index: 5, kind: input, shape index: {}]
  %s6 = inlined_call_operand.vmem [shape: f32[32,128], index: 6, kind: output, shape index: {0}]
  %s7 = inlined_call_operand.vmem [shape: f32[16,64], index: 7, kind: output, shape index: {1}]
  %8 = xla_tuple %s6, %s7
  %s9 = sld [smem:[#allocation0]]
  $region65: #{resblock_forward.3} parent=0
    _
  %s11 = ssub.s32 1, %s9
  %s12 = scalar_select 0, %s11, %s9
  loop: start=0, step=1, limit=4
  $region2: #{resblock_forward.3} parent=0 // loop_pre_header
    _
  $region3: #{resblock_forward.3} parent=0 // loop_header
    %s14 = sphi 0, %s18
    %p15 = scmp.ge.s32.totalorder %s14, 4
    %s24 = sphi 0, %s26
    %s27 = sphi 0, %s24
    %s28 = sphi 0, %s27
    %s44 = sphi 0, %s28
    %s50 = sphi 0, %s52
    %s53 = sphi 0, %s50
    %s54 = sphi 0, %s53
    %s70 = sphi 0, %s54
    %s74 = sphi 0, %s74
    %s76 = sphi 0, %s74
    %s77 = sphi 0, %s76
    %s91 = sphi 0, %s77
    %s95 = sphi 0, %s95
    %s97 = sphi 0, %s95
    %s98 = sphi 0, %s97
    %s112 = sphi 0, %s98
    %s116 = sphi 0, %s116
    %s118 = sphi 0, %s116
    %s119 = sphi 0, %s118
    %s133 = sphi 0, %s119
    %s137 = sphi 0, %s137
    %s139 = sphi 0, %s137
    %s140 = sphi 0, %s139
    %s154 = sphi 0, %s140
    %s160 = sphi 0, %s162
    %s163 = sphi 0, %s160
    %s164 = sphi 0, %s163
    %s180 = sphi 0, %s164
    %s186 = sphi 0, %s188
    %s189 = sphi 0, %s186
    %s190 = sphi 0, %s189
    %s206 = sphi 0, %s190
  $region4: #{resblock_forward.3} parent=0 // loop_header_branch
    %17 = sbr.rel (%p15) target = $region8
  $region5: #{resblock_forward.3} parent=0 // loop_body
    %s19 = ssub.s32 %s14, 1
    %s20 = ssub.s32 %s14, 2
    %s21 = sadd.s32 %s14, 1
    %s22 = ssub.s32 %s14, %s21
    %p23 = scmp.eq.s32.totalorder %s22, 0
    %s25 = sadd.s32 %s24, 1
    %s26 = scalar_select %p23, %s24, %s25
    %p29 = pneg %p23
    %p30 = scmp.eq.s32.totalorder %s14, 1
    %p31 = por %p29, %p30
    %p32 = scmp.ne.s32.totalorder %s24, %s27
    %p33 = scmp.eq.s32.totalorder %s14, 0
    %p34 = por %p32, %p33
    %p35 = scmp.ne.s32.totalorder %s24, %s27
    %p36 = scmp.eq.s32.totalorder %s19, 1
    %p37 = por %p35, %p36
    %p38 = scmp.ne.s32.totalorder %s27, %s28
    %p39 = scmp.eq.s32.totalorder %s19, 0
    %p40 = por %p38, %p39
    %p41 = scmp.ne.s32.totalorder %s27, %s28
    %p42 = scmp.eq.s32.totalorder %s20, 1
    %p43 = por %p41, %p42
    %p45 = scmp.ne.s32.totalorder %s28, %s44
    %p46 = scmp.eq.s32.totalorder %s20, 0
    %p47 = por %p45, %p46
    %s48 = ssub.s32 %s14, %s21
    %p49 = scmp.eq.s32.totalorder %s48, 0
    %s51 = sadd.s32 %s50, 1
    %s52 = scalar_select %p49, %s50, %s51
    %p55 = pneg %p49
    %p56 = scmp.eq.s32.totalorder %s14, 1
    %p57 = por %p55, %p56
    %p58 = scmp.ne.s32.totalorder %s50, %s53
    %p59 = scmp.eq.s32.totalorder %s14, 0
    %p60 = por %p58, %p59
    %p61 = scmp.ne.s32.totalorder %s50, %s53
    %p62 = scmp.eq.s32.totalorder %s19, 1
    %p63 = por %p61, %p62
    %p64 = scmp.ne.s32.totalorder %s53, %s54
    %p65 = scmp.eq.s32.totalorder %s19, 0
    %p66 = por %p64, %p65
    %p67 = scmp.ne.s32.totalorder %s53, %s54
    %p68 = scmp.eq.s32.totalorder %s20, 1
    %p69 = por %p67, %p68
    %p71 = scmp.ne.s32.totalorder %s54, %s70
    %p72 = scmp.eq.s32.totalorder %s20, 0
    %p73 = por %p71, %p72
    %s75 = sadd.s32 %s74, 1
    %p78 = scmp.eq.s32.totalorder %s14, 1
    %p79 = scmp.ne.s32.totalorder %s74, %s76
    %p80 = scmp.eq.s32.totalorder %s14, 0
    %p81 = por %p79, %p80
    %p82 = scmp.ne.s32.totalorder %s74, %s76
    %p83 = scmp.eq.s32.totalorder %s19, 1
    %p84 = por %p82, %p83
    %p85 = scmp.ne.s32.totalorder %s76, %s77
    %p86 = scmp.eq.s32.totalorder %s19, 0
    %p87 = por %p85, %p86
    %p88 = scmp.ne.s32.totalorder %s76, %s77
    %p89 = scmp.eq.s32.totalorder %s20, 1
    %p90 = por %p88, %p89
    %p92 = scmp.ne.s32.totalorder %s77, %s91
    %p93 = scmp.eq.s32.totalorder %s20, 0
    %p94 = por %p92, %p93
    %s96 = sadd.s32 %s95, 1
    %p99 = scmp.eq.s32.totalorder %s14, 1
    %p100 = scmp.ne.s32.totalorder %s95, %s97
    %p101 = scmp.eq.s32.totalorder %s14, 0
    %p102 = por %p100, %p101
    %p103 = scmp.ne.s32.totalorder %s95, %s97
    %p104 = scmp.eq.s32.totalorder %s19, 1
    %p105 = por %p103, %p104
    %p106 = scmp.ne.s32.totalorder %s97, %s98
    %p107 = scmp.eq.s32.totalorder %s19, 0
    %p108 = por %p106, %p107
    %p109 = scmp.ne.s32.totalorder %s97, %s98
    %p110 = scmp.eq.s32.totalorder %s20, 1
    %p111 = por %p109, %p110
    %p113 = scmp.ne.s32.totalorder %s98, %s112
    %p114 = scmp.eq.s32.totalorder %s20, 0
    %p115 = por %p113, %p114
    %s117 = sadd.s32 %s116, 1
    %p120 = scmp.eq.s32.totalorder %s14, 1
    %p121 = scmp.ne.s32.totalorder %s116, %s118
    %p122 = scmp.eq.s32.totalorder %s14, 0
    %p123 = por %p121, %p122
    %p124 = scmp.ne.s32.totalorder %s116, %s118
    %p125 = scmp.eq.s32.totalorder %s19, 1
    %p126 = por %p124, %p125
    %p127 = scmp.ne.s32.totalorder %s118, %s119
    %p128 = scmp.eq.s32.totalorder %s19, 0
    %p129 = por %p127, %p128
    %p130 = scmp.ne.s32.totalorder %s118, %s119
    %p131 = scmp.eq.s32.totalorder %s20, 1
    %p132 = por %p130, %p131
    %p134 = scmp.ne.s32.totalorder %s119, %s133
    %p135 = scmp.eq.s32.totalorder %s20, 0
    %p136 = por %p134, %p135
    %s138 = sadd.s32 %s137, 1
    %p141 = scmp.eq.s32.totalorder %s14, 1
    %p142 = scmp.ne.s32.totalorder %s137, %s139
    %p143 = scmp.eq.s32.totalorder %s14, 0
    %p144 = por %p142, %p143
    %p145 = scmp.ne.s32.totalorder %s137, %s139
    %p146 = scmp.eq.s32.totalorder %s19, 1
    %p147 = por %p145, %p146
    %p148 = scmp.ne.s32.totalorder %s139, %s140
    %p149 = scmp.eq.s32.totalorder %s19, 0
    %p150 = por %p148, %p149
    %p151 = scmp.ne.s32.totalorder %s139, %s140
    %p152 = scmp.eq.s32.totalorder %s20, 1
    %p153 = por %p151, %p152
    %p155 = scmp.ne.s32.totalorder %s140, %s154
    %p156 = scmp.eq.s32.totalorder %s20, 0
    %p157 = por %p155, %p156
    %s158 = ssub.s32 %s14, %s21
    %p159 = scmp.eq.s32.totalorder %s158, 0
    %s161 = sadd.s32 %s160, 1
    %s162 = scalar_select %p159, %s160, %s161
    %p165 = pneg %p159
    %p166 = scmp.eq.s32.totalorder %s14, 1
    %p167 = por %p165, %p166
    %p168 = scmp.ne.s32.totalorder %s160, %s163
    %p169 = scmp.eq.s32.totalorder %s14, 0
    %p170 = por %p168, %p169
    %p171 = scmp.ne.s32.totalorder %s160, %s163
    %p172 = scmp.eq.s32.totalorder %s19, 1
    %p173 = por %p171, %p172
    %p174 = scmp.ne.s32.totalorder %s163, %s164
    %p175 = scmp.eq.s32.totalorder %s19, 0
    %p176 = por %p174, %p175
    %p177 = scmp.ne.s32.totalorder %s163, %s164
    %p178 = scmp.eq.s32.totalorder %s20, 1
    %p179 = por %p177, %p178
    %p181 = scmp.ne.s32.totalorder %s164, %s180
    %p182 = scmp.eq.s32.totalorder %s20, 0
    %p183 = por %p181, %p182
    %s184 = ssub.s32 %s14, %s21
    %p185 = scmp.eq.s32.totalorder %s184, 0
    %s187 = sadd.s32 %s186, 1
    %s188 = scalar_select %p185, %s186, %s187
    %p191 = pneg %p185
    %p192 = scmp.eq.s32.totalorder %s14, 1
    %p193 = por %p191, %p192
    %p194 = scmp.ne.s32.totalorder %s186, %s189
    %p195 = scmp.eq.s32.totalorder %s14, 0
    %p196 = por %p194, %p195
    %p197 = scmp.ne.s32.totalorder %s186, %s189
    %p198 = scmp.eq.s32.totalorder %s19, 1
    %p199 = por %p197, %p198
    %p200 = scmp.ne.s32.totalorder %s189, %s190
    %p201 = scmp.eq.s32.totalorder %s19, 0
    %p202 = por %p200, %p201
    %p203 = scmp.ne.s32.totalorder %s189, %s190
    %p204 = scmp.eq.s32.totalorder %s20, 1
    %p205 = por %p203, %p204
    %p207 = scmp.ne.s32.totalorder %s190, %s206
    %p208 = scmp.eq.s32.totalorder %s20, 0
    %p209 = por %p207, %p208
    %p210 = scmp.le.s32.totalorder 1, %s14
    %p211 = scmp.lt.s32.totalorder %s14, 3
    %p212 = pnand %p210, %p211
    %p213 = pneg %p212
    // Predicated region
    $region9: #{resblock_forward.3} parent=5 // pred_check
      _
    $region10: #{resblock_forward.3} parent=5 // pred_check_branch
      %215 = sbr.rel (%p212) target = $region12
    $region11: #{resblock_forward.3} parent=5 // pred_region
      %s216 = ssub.s32 %s14, 1
      // Predicated region
      $region13: #{resblock_forward.3} parent=11 // pred_check
        %p217 = pneg %p87
      $region14: #{resblock_forward.3} parent=11 // pred_check_branch
        %219 = sbr.rel (%p217) target = $region16
      $region15: #{resblock_forward.3} parent=11 // pred_region
        _
      $region16: #{resblock_forward.3} parent=11 // pred_fallthru
        _
      // Predicated region
      $region17: #{resblock_forward.3} parent=11 // pred_check
        %p220 = pneg %p108
      $region18: #{resblock_forward.3} parent=11 // pred_check_branch
        %222 = sbr.rel (%p220) target = $region20
      $region19: #{resblock_forward.3} parent=11 // pred_region
        _
      $region20: #{resblock_forward.3} parent=11 // pred_fallthru
        _
      // Predicated region
      $region21: #{resblock_forward.3} parent=11 // pred_check
        %p223 = pneg %p129
      $region22: #{resblock_forward.3} parent=11 // pred_check_branch
        %225 = sbr.rel (%p223) target = $region24
      $region23: #{resblock_forward.3} parent=11 // pred_region
        _
      $region24: #{resblock_forward.3} parent=11 // pred_fallthru
        _
      // Predicated region
      $region25: #{resblock_forward.3} parent=11 // pred_check
        %p226 = pneg %p150
      $region26: #{resblock_forward.3} parent=11 // pred_check_branch
        %228 = sbr.rel (%p226) target = $region28
      $region27: #{resblock_forward.3} parent=11 // pred_region
        _
      $region28: #{resblock_forward.3} parent=11 // pred_fallthru
        _
    $region12: #{resblock_forward.3} parent=5 // pred_fallthru
      _
    %p229 = scmp.lt.s32.totalorder %s14, 2
    // Predicated region
    $region29: #{resblock_forward.3} parent=5 // pred_check
      %p230 = pneg %p229
    $region30: #{resblock_forward.3} parent=5 // pred_check_branch
      %232 = sbr.rel (%p230) target = $region32
    $region31: #{resblock_forward.3} parent=5 // pred_region
      // Predicated region
      $region33: #{resblock_forward.3} parent=31 // pred_check
        %p233 = pneg %p34
      $region34: #{resblock_forward.3} parent=31 // pred_check_branch
        %235 = sbr.rel (%p233) target = $region36
      $region35: #{resblock_forward.3} parent=31 // pred_region
        %s236 = smul.u32 2, %s14
        %p237 = scmp.lt.s32.totalorder %s236, 3
        %s238 = scalar_select %p237, %s236, 3
        %s239 = smul.addr %s238, 8
        %s240 = scalar_lea.vmem %s0, %s239
        %s241 = smul.u32 2, %s14
      $region36: #{resblock_forward.3} parent=31 // pred_fallthru
        _
      // Predicated region
      $region37: #{resblock_forward.3} parent=31 // pred_check
        %p242 = pneg %p60
      $region38: #{resblock_forward.3} parent=31 // pred_check_branch
        %244 = sbr.rel (%p242) target = $region40
      $region39: #{resblock_forward.3} parent=31 // pred_region
        %s245 = smul.u32 2, %s14
        %p246 = scmp.lt.s32.totalorder %s245, 3
        %s247 = scalar_select %p246, %s245, 3
        %s248 = smul.addr %s247, 8
        %s249 = scalar_lea.vmem %s1, %s248
        %s250 = smul.u32 2, %s14
      $region40: #{resblock_forward.3} parent=31 // pred_fallthru
        _
    $region32: #{resblock_forward.3} parent=5 // pred_fallthru
      _
    %p251 = scmp.le.s32.totalorder 1, %s14
    %p252 = scmp.lt.s32.totalorder %s14, 3
    %p253 = pnand %p251, %p252
    %p254 = pneg %p253
    // Predicated region
    $region41: #{resblock_forward.3} parent=5 // pred_check
      _
    $region42: #{resblock_forward.3} parent=5 // pred_check_branch
      %256 = sbr.rel (%p253) target = $region44
    $region43: #{resblock_forward.3} parent=5 // pred_region
      %s257 = ssub.s32 %s14, 1
      %s258 = smul.u32 2, %s19
      %p259 = scmp.lt.s32.totalorder %s258, 3
      %s260 = scalar_select %p259, %s258, 3
      %s261 = smul.addr %s260, 8
      %s262 = scalar_lea.vmem %s0, %s261
      %p263 = pneg %p40
      %p264 = pneg %p37
      %s265 = smul.u32 2, %s19
      %p266 = scmp.lt.s32.totalorder %s265, 3
      %s267 = scalar_select %p266, %s265, 3
      %s268 = smul.addr %s267, 8
      %s269 = scalar_lea.vmem %s1, %s268
      %p270 = pneg %p66
      %p271 = pneg %p63
      %p272 = pneg %p87
      %p273 = pneg %p84
      %p274 = pneg %p108
      %p275 = pneg %p105
      %p276 = pneg %p129
      %p277 = pneg %p126
      %p278 = pneg %p150
      %p279 = pneg %p147
      %p280 = pneg %p176
      %p281 = pneg %p173
      %s282 = smul.u32 2, %s19
      %p283 = scmp.lt.s32.totalorder %s282, 3
      %s284 = scalar_select %p283, %s282, 3
      %s285 = smul.addr %s284, 8
      %s286 = scalar_lea.vmem %s6, %s285
      %p287 = pneg %p202
      %p288 = pneg %p199
      %p289 = scmp.lt.s32.totalorder %s19, 1
      %s290 = scalar_select %p289, %s19, 1
      %s291 = smul.addr %s290, 8
      %s292 = scalar_lea.vmem %s7, %s291
      %s293 = smul.u32 2, %s19
      %p294 = scmp.lt.s32.totalorder %s293, 3
      %s295 = scalar_select %p294, %s293, 3
      %s296 = smul.addr %s295, 8
      %s297 = scalar_lea.vmem %s0, %s296
      %s298 = smul.u32 2, %s19
      %s299 = smul.u32 2, %s19
      %p300 = scmp.lt.s32.totalorder %s299, 3
      %s301 = scalar_select %p300, %s299, 3
      %s302 = smul.addr %s301, 8
      %s303 = scalar_lea.vmem %s1, %s302
      %s304 = smul.u32 2, %s19
      %s305 = smul.u32 2, %s19
      %p306 = scmp.lt.s32.totalorder %s305, 3
      %s307 = scalar_select %p306, %s305, 3
      %s308 = smul.addr %s307, 8
      %s309 = scalar_lea.vmem %s6, %s308
      %s310 = smul.u32 2, %s19
      %p311 = scmp.lt.s32.totalorder %s19, 1
      %s312 = scalar_select %p311, %s19, 1
      %s313 = smul.addr %s312, 8
      %s314 = scalar_lea.vmem %s7, %s313
      %v315 = vld [vmem:[%s303] sm:$0xff]
      %v316 = vld [vmem:[%s303 + $0x8] sm:$0xff]
      %v317 = vld [vmem:[%s297] sm:$0xff]
      %v318 = vld [vmem:[%s297 + $0x8] sm:$0xff]
      %v319 = vld [vmem:[%s2] sm:$0x1]
      %v321 = vlaneseq
      %v322 = vshrl.u32 %v321, 7
      %v323 = vsub.s32 0, %v322
      %v324 = vrot.slane %v319, %v323
      %v326 = vmul.f32 %v317, %v324
      %v327 = vmul.f32 %v318, %v324
      %v328 = vadd.f32 %v315, %v326
      %v329 = vadd.f32 %v316, %v327
      %v330 = vld [vmem:[%s3] sm:$0x1]
      %v332 = vlaneseq
      %v333 = vshrl.u32 %v332, 7
      %v334 = vsub.s32 0, %v333
      %v335 = vrot.slane %v330, %v334
      %v337 = vadd.f32 %v328, %v335
      %v338 = vadd.f32 %v329, %v335
      %339 = vst [vmem:[%s309] sm:$0xff] %v337
      %340 = vst [vmem:[%s309 + $0x8] sm:$0xff] %v338
      %v341 = vld [vmem:[%s4] sm:$0xff]
      %vm342 = vcmask 130048
      %v344 = vsel %vm342, %v341, 0
      %346 = vmatprep.subr.mxu0 0.0
      %347 = vmatpush1.msra.mxu0 %v337
      %348 = vmatprep.subr.mxu0 0.0
      %349 = vmatpush1.msra.mxu0 %v338
      %350 = vmatprep.subr.mxu0 0.0
      %351 = vmatpush1.msra.mxu0 0.0
      %352 = vmatprep.subr.mxu0 0.0
      %353 = vmatpush1.msra.mxu0 0.0
      %354 = vmatprep.subr.mxu0 0.0
      %355 = vmatpush1.msra.mxu0 0.0
      %356 = vmatprep.subr.mxu0 0.0
      %357 = vmatpush1.msra.mxu0 0.0
      %358 = vmatprep.subr.mxu0 0.0
      %359 = vmatpush1.msra.mxu0 0.0
      %360 = vmatprep.subr.mxu0 0.0
      %361 = vmatpush1.msra.mxu0 0.0
      %362 = vmatprep.subr.mxu0 0.0
      %363 = vmatpush1.msra.mxu0 0.0
      %364 = vmatprep.subr.mxu0 0.0
      %365 = vmatpush1.msra.mxu0 0.0
      %366 = vmatprep.subr.mxu0 0.0
      %367 = vmatpush1.msra.mxu0 0.0
      %368 = vmatprep.subr.mxu0 0.0
      %369 = vmatpush1.msra.mxu0 0.0
      %370 = vmatprep.subr.mxu0 0.0
      %371 = vmatpush1.msra.mxu0 0.0
      %372 = vmatprep.subr.mxu0 0.0
      %373 = vmatpush1.msra.mxu0 0.0
      %374 = vmatprep.subr.mxu0 0.0
      %375 = vmatpush1.msra.mxu0 0.0
      %376 = vmatprep.subr.mxu0 0.0
      %377 = vmatpush1.msra.mxu0 0.0
      %378 = vmatprep.subr.mxu0 0.0
      %379 = vmatpush1.msra.mxu0 0.0
      %380 = vmatprep.subr.mxu0 0.0
      %381 = vmatpush1.msra.mxu0 0.0
      %382 = vmatprep.subr.mxu0 0.0
      %383 = vmatpush1.msra.mxu0 0.0
      %384 = vmatprep.subr.mxu0 0.0
      %385 = vmatpush1.msra.mxu0 0.0
      %386 = vmatprep.subr.mxu0 0.0
      %387 = vmatpush1.msra.mxu0 0.0
      %388 = vmatprep.subr.mxu0 0.0
      %389 = vmatpush1.msra.mxu0 0.0
      %390 = vmatprep.subr.mxu0 0.0
      %391 = vmatpush1.msra.mxu0 0.0
      %392 = vmatprep.subr.mxu0 0.0
      %393 = vmatpush1.msra.mxu0 0.0
      %394 = vmatprep.subr.mxu0 0.0
      %395 = vmatpush1.msra.mxu0 0.0
      %396 = vmatprep.subr.mxu0 0.0
      %397 = vmatpush1.msra.mxu0 0.0
      %398 = vmatprep.subr.mxu0 0.0
      %399 = vmatpush1.msra.mxu0 0.0
      %400 = vmatprep.subr.mxu0 0.0
      %401 = vmatpush1.msra.mxu0 0.0
      %402 = vmatprep.subr.mxu0 0.0
      %403 = vmatpush1.msra.mxu0 0.0
      %404 = vmatprep.subr.mxu0 0.0
      %405 = vmatpush1.msra.mxu0 0.0
      %406 = vmatprep.subr.mxu0 0.0
      %407 = vmatpush1.msra.mxu0 0.0
      %408 = vmatprep.subr.mxu0 0.0
      %409 = vmatpush1.msra.mxu0 0.0
      %410 = vmatprep.mubr.f32.mxu0 0.0
      %411 = vmatmul.mubr.f32.gmra.mrb[0].mxu0 %v344
      %v412 = vpop.f32.mrb[0].mxu0
      %v413 = vadd.f32 0.0, %v412
      %v414 = vpop.f32.mrb[0].mxu0
      %415 = vdwg.mxu0
      %v416 = vld [vmem:[%s5] sm:$0xff]
      %v417 = vld [vmem:[%s5 + $0x8] sm:$0xff]
      %v418 = vld [vmem:[%s5 + $0x10] sm:$0xff]
      %v419 = vld [vmem:[%s5 + $0x18] sm:$0xff]
      %v420 = vld [vmem:[%s5 + $0x20] sm:$0xff]
      %v421 = vld [vmem:[%s5 + $0x28] sm:$0xff]
      %v422 = vld [vmem:[%s5 + $0x30] sm:$0xff]
      %v423 = vld [vmem:[%s5 + $0x38] sm:$0xff]
      %v424 = vld [vmem:[%s5 + $0x40] sm:$0xff]
      %v425 = vld [vmem:[%s5 + $0x48] sm:$0xff]
      %v426 = vld [vmem:[%s5 + $0x50] sm:$0xff]
      %v427 = vld [vmem:[%s5 + $0x58] sm:$0xff]
      %v428 = vld [vmem:[%s5 + $0x60] sm:$0xff]
      %v429 = vld [vmem:[%s5 + $0x68] sm:$0xff]
      %v430 = vld [vmem:[%s5 + $0x70] sm:$0xff]
      %v431 = vld [vmem:[%s5 + $0x78] sm:$0xff]
      %432 = vmatprep.subr.mxu0 0.0
      %433 = vmatpush1.msra.mxu0 %v416
      %434 = vmatprep.subr.mxu0 0.0
      %435 = vmatpush1.msra.mxu0 %v417
      %436 = vmatprep.subr.mxu0 0.0
      %437 = vmatpush1.msra.mxu0 %v418
      %438 = vmatprep.subr.mxu0 0.0
      %439 = vmatpush1.msra.mxu0 %v419
      %440 = vmatprep.subr.mxu0 0.0
      %441 = vmatpush1.msra.mxu0 %v420
      %442 = vmatprep.subr.mxu0 0.0
      %443 = vmatpush1.msra.mxu0 %v421
      %444 = vmatprep.subr.mxu0 0.0
      %445 = vmatpush1.msra.mxu0 %v422
      %446 = vmatprep.subr.mxu0 0.0
      %447 = vmatpush1.msra.mxu0 %v423
      %448 = vmatprep.subr.mxu0 0.0
      %449 = vmatpush1.msra.mxu0 %v424
      %450 = vmatprep.subr.mxu0 0.0
      %451 = vmatpush1.msra.mxu0 %v425
      %452 = vmatprep.subr.mxu0 0.0
      %453 = vmatpush1.msra.mxu0 %v426
      %454 = vmatprep.subr.mxu0 0.0
      %455 = vmatpush1.msra.mxu0 %v427
      %456 = vmatprep.subr.mxu0 0.0
      %457 = vmatpush1.msra.mxu0 %v428
      %458 = vmatprep.subr.mxu0 0.0
      %459 = vmatpush1.msra.mxu0 %v429
      %460 = vmatprep.subr.mxu0 0.0
      %461 = vmatpush1.msra.mxu0 %v430
      %462 = vmatprep.subr.mxu0 0.0
      %463 = vmatpush1.msra.mxu0 %v431
      %464 = vmatprep.subr.mxu0 0.0
      %465 = vmatpush1.msra.mxu0 0.0
      %466 = vmatprep.subr.mxu0 0.0
      %467 = vmatpush1.msra.mxu0 0.0
      %468 = vmatprep.subr.mxu0 0.0
      %469 = vmatpush1.msra.mxu0 0.0
      %470 = vmatprep.subr.mxu0 0.0
      %471 = vmatpush1.msra.mxu0 0.0
      %472 = vmatprep.subr.mxu0 0.0
      %473 = vmatpush1.msra.mxu0 0.0
      %474 = vmatprep.subr.mxu0 0.0
      %475 = vmatpush1.msra.mxu0 0.0
      %476 = vmatprep.subr.mxu0 0.0
      %477 = vmatpush1.msra.mxu0 0.0
      %478 = vmatprep.subr.mxu0 0.0
      %479 = vmatpush1.msra.mxu0 0.0
      %480 = vmatprep.subr.mxu0 0.0
      %481 = vmatpush1.msra.mxu0 0.0
      %482 = vmatprep.subr.mxu0 0.0
      %483 = vmatpush1.msra.mxu0 0.0
      %484 = vmatprep.subr.mxu0 0.0
      %485 = vmatpush1.msra.mxu0 0.0
      %486 = vmatprep.subr.mxu0 0.0
      %487 = vmatpush1.msra.mxu0 0.0
      %488 = vmatprep.subr.mxu0 0.0
      %489 = vmatpush1.msra.mxu0 0.0
      %490 = vmatprep.subr.mxu0 0.0
      %491 = vmatpush1.msra.mxu0 0.0
      %492 = vmatprep.subr.mxu0 0.0
      %493 = vmatpush1.msra.mxu0 0.0
      %494 = vmatprep.subr.mxu0 0.0
      %495 = vmatpush1.msra.mxu0 0.0
      %496 = vmatprep.mubr.f32.mxu0 0.0
      %497 = vmatmul.mubr.f32.gmra.mrb[0].mxu0 %v413
      %v498 = vpop.f32.mrb[0].mxu0
      %v499 = vadd.f32 0.0, %v498
      %v500 = vpop.f32.mrb[0].mxu0
      %501 = vdwg.mxu0
      %vm502 = vcmask 523264
      %503 = vst.msk [vmem:[%s314] sm:$0xff] %vm502, %v499
      %s504 = smul.u32 2, %s19
      %p505 = scmp.lt.s32.totalorder %s504, 3
      %s506 = scalar_select %p505, %s504, 3
      %s507 = smul.addr %s506, 8
      %s508 = scalar_lea.vmem %s6, %s507
      %p509 = scmp.lt.s32.totalorder %s19, 1
      %s510 = scalar_select %p509, %s19, 1
      %s511 = smul.addr %s510, 8
      %s512 = scalar_lea.vmem %s7, %s511
      // Predicated region
      $region45: #{resblock_forward.3} parent=43 // pred_check
        %p513 = pneg %p173
      $region46: #{resblock_forward.3} parent=43 // pred_check_branch
        %515 = sbr.rel (%p513) target = $region48
      $region47: #{resblock_forward.3} parent=43 // pred_region
        %s516 = smul.u32 2, %s19
      $region48: #{resblock_forward.3} parent=43 // pred_fallthru
        _
      // Predicated region
      $region49: #{resblock_forward.3} parent=43 // pred_check
        %p517 = pneg %p199
      $region50: #{resblock_forward.3} parent=43 // pred_check_branch
        %519 = sbr.rel (%p517) target = $region52
      $region51: #{resblock_forward.3} parent=43 // pred_region
        _
      $region52: #{resblock_forward.3} parent=43 // pred_fallthru
        _
    $region44: #{resblock_forward.3} parent=5 // pred_fallthru
      _
    %p520 = scmp.le.s32.totalorder 2, %s14
    // Predicated region
    $region53: #{resblock_forward.3} parent=5 // pred_check
      %p521 = pneg %p520
    $region54: #{resblock_forward.3} parent=5 // pred_check_branch
      %523 = sbr.rel (%p521) target = $region56
    $region55: #{resblock_forward.3} parent=5 // pred_region
      %s524 = ssub.s32 %s14, 2
      // Predicated region
      $region57: #{resblock_forward.3} parent=55 // pred_check
        %p525 = pneg %p179
      $region58: #{resblock_forward.3} parent=55 // pred_check_branch
        %527 = sbr.rel (%p525) target = $region60
      $region59: #{resblock_forward.3} parent=55 // pred_region
        %s528 = smul.u32 2, %s20
        %p529 = scmp.lt.s32.totalorder %s528, 3
        %s530 = scalar_select %p529, %s528, 3
        %s531 = smul.addr %s530, 8
        %s532 = scalar_lea.vmem %s6, %s531
      $region60: #{resblock_forward.3} parent=55 // pred_fallthru
        _
      // Predicated region
      $region61: #{resblock_forward.3} parent=55 // pred_check
        %p533 = pneg %p205
      $region62: #{resblock_forward.3} parent=55 // pred_check_branch
        %535 = sbr.rel (%p533) target = $region64
      $region63: #{resblock_forward.3} parent=55 // pred_region
        %p536 = scmp.lt.s32.totalorder %s20, 1
        %s537 = scalar_select %p536, %s20, 1
        %s538 = smul.addr %s537, 8
        %s539 = scalar_lea.vmem %s7, %s538
      $region64: #{resblock_forward.3} parent=55 // pred_fallthru
        _
    $region56: #{resblock_forward.3} parent=5 // pred_fallthru
      _
  $region6: #{resblock_forward.3} parent=0 // loop_footer
    %s18 = sadd.s32 1, %s14
  $region7: #{resblock_forward.3} parent=0 // loop_footer_branch
    %13 = sbr.rel target = $region3
  $region8: #{resblock_forward.3} parent=0 // loop_exit
    _

// kernel: resblock_forward.2
$region0: #{resblock_forward.2}
  #allocation0 [shape = 'u32[]', space=smem, size = 0x4, offset = 0x4, fixed_abs, tag = 'smem constant byte address 0x4 - core index']
  #allocation1 [shape = 'u32[144,128]{1,0:T(1,128)}', space=vmem, size = 0x12000, scoped, tag = 'internal scratch']
  %s0 = inlined_call_operand.vmem [shape: bf16[512,36], index: 0, kind: input, shape index: {}]
  %s1 = inlined_call_operand.vmem [shape: bf16[36,16], index: 1, kind: input, shape index: {}]
  %s2 = inlined_call_operand.vmem [shape: f32[1,16], index: 2, kind: input, shape index: {}]
  %s3 = inlined_call_operand.vmem [shape: f32[512,8], index: 3, kind: output, shape index: {0}]
  %s4 = inlined_call_operand.vmem [shape: f32[512,8], index: 4, kind: output, shape index: {1}]
  %s5 = inlined_call_operand.vmem [shape: f32[1,8], index: 5, kind: output, shape index: {2}]
  %s6 = inlined_call_operand.vmem [shape: f32[1,8], index: 6, kind: output, shape index: {3}]
  %7 = xla_tuple %s3, %s4, %s5, %s6
  %s8 = sld [smem:[#allocation0]]
  $region77: #{resblock_forward.2} parent=0
    _
  %s10 = ssub.s32 1, %s8
  %s11 = scalar_select 0, %s10, %s8
  loop: start=0, step=1, limit=4
  $region2: #{resblock_forward.2} parent=0 // loop_pre_header
    _
  $region3: #{resblock_forward.2} parent=0 // loop_header
    %s13 = sphi 0, %s17
    %p14 = scmp.ge.s32.totalorder %s13, 4
    %s23 = sphi 0, %s25
    %s26 = sphi 0, %s23
    %s27 = sphi 0, %s26
    %s43 = sphi 0, %s27
    %s47 = sphi 0, %s47
    %s49 = sphi 0, %s47
    %s50 = sphi 0, %s49
    %s64 = sphi 0, %s50
    %s68 = sphi 0, %s68
    %s70 = sphi 0, %s68
    %s71 = sphi 0, %s70
    %s85 = sphi 0, %s71
    %s91 = sphi 0, %s93
    %s94 = sphi 0, %s91
    %s95 = sphi 0, %s94
    %s111 = sphi 0, %s95
    %s117 = sphi 0, %s119
    %s120 = sphi 0, %s117
    %s121 = sphi 0, %s120
    %s137 = sphi 0, %s121
    %s141 = sphi 0, %s141
    %s143 = sphi 0, %s141
    %s144 = sphi 0, %s143
    %s158 = sphi 0, %s144
    %s162 = sphi 0, %s162
    %s164 = sphi 0, %s162
    %s165 = sphi 0, %s164
    %s179 = sphi 0, %s165
  $region4: #{resblock_forward.2} parent=0 // loop_header_branch
    %16 = sbr.rel (%p14) target = $region8
  $region5: #{resblock_forward.2} parent=0 // loop_body
    %s18 = ssub.s32 %s13, 1
    %s19 = ssub.s32 %s13, 2
    %s20 = sadd.s32 %s13, 1
    %s21 = ssub.s32 %s13, %s20
    %p22 = scmp.eq.s32.totalorder %s21, 0
    %s24 = sadd.s32 %s23, 1
    %s25 = scalar_select %p22, %s23, %s24
    %p28 = pneg %p22
    %p29 = scmp.eq.s32.totalorder %s13, 1
    %p30 = por %p28, %p29
    %p31 = scmp.ne.s32.totalorder %s23, %s26
    %p32 = scmp.eq.s32.totalorder %s13, 0
    %p33 = por %p31, %p32
    %p34 = scmp.ne.s32.totalorder %s23, %s26
    %p35 = scmp.eq.s32.totalorder %s18, 1
    %p36 = por %p34, %p35
    %p37 = scmp.ne.s32.totalorder %s26, %s27
    %p38 = scmp.eq.s32.totalorder %s18, 0
    %p39 = por %p37, %p38
    %p40 = scmp.ne.s32.totalorder %s26, %s27
    %p41 = scmp.eq.s32.totalorder %s19, 1
    %p42 = por %p40, %p41
    %p44 = scmp.ne.s32.totalorder %s27, %s43
    %p45 = scmp.eq.s32.totalorder %s19, 0
    %p46 = por %p44, %p45
    %s48 = sadd.s32 %s47, 1
    %p51 = scmp.eq.s32.totalorder %s13, 1
    %p52 = scmp.ne.s32.totalorder %s47, %s49
    %p53 = scmp.eq.s32.totalorder %s13, 0
    %p54 = por %p52, %p53
    %p55 = scmp.ne.s32.totalorder %s47, %s49
    %p56 = scmp.eq.s32.totalorder %s18, 1
    %p57 = por %p55, %p56
    %p58 = scmp.ne.s32.totalorder %s49, %s50
    %p59 = scmp.eq.s32.totalorder %s18, 0
    %p60 = por %p58, %p59
    %p61 = scmp.ne.s32.totalorder %s49, %s50
    %p62 = scmp.eq.s32.totalorder %s19, 1
    %p63 = por %p61, %p62
    %p65 = scmp.ne.s32.totalorder %s50, %s64
    %p66 = scmp.eq.s32.totalorder %s19, 0
    %p67 = por %p65, %p66
    %s69 = sadd.s32 %s68, 1
    %p72 = scmp.eq.s32.totalorder %s13, 1
    %p73 = scmp.ne.s32.totalorder %s68, %s70
    %p74 = scmp.eq.s32.totalorder %s13, 0
    %p75 = por %p73, %p74
    %p76 = scmp.ne.s32.totalorder %s68, %s70
    %p77 = scmp.eq.s32.totalorder %s18, 1
    %p78 = por %p76, %p77
    %p79 = scmp.ne.s32.totalorder %s70, %s71
    %p80 = scmp.eq.s32.totalorder %s18, 0
    %p81 = por %p79, %p80
    %p82 = scmp.ne.s32.totalorder %s70, %s71
    %p83 = scmp.eq.s32.totalorder %s19, 1
    %p84 = por %p82, %p83
    %p86 = scmp.ne.s32.totalorder %s71, %s85
    %p87 = scmp.eq.s32.totalorder %s19, 0
    %p88 = por %p86, %p87
    %s89 = ssub.s32 %s13, %s20
    %p90 = scmp.eq.s32.totalorder %s89, 0
    %s92 = sadd.s32 %s91, 1
    %s93 = scalar_select %p90, %s91, %s92
    %p96 = pneg %p90
    %p97 = scmp.eq.s32.totalorder %s13, 1
    %p98 = por %p96, %p97
    %p99 = scmp.ne.s32.totalorder %s91, %s94
    %p100 = scmp.eq.s32.totalorder %s13, 0
    %p101 = por %p99, %p100
    %p102 = scmp.ne.s32.totalorder %s91, %s94
    %p103 = scmp.eq.s32.totalorder %s18, 1
    %p104 = por %p102, %p103
    %p105 = scmp.ne.s32.totalorder %s94, %s95
    %p106 = scmp.eq.s32.totalorder %s18, 0
    %p107 = por %p105, %p106
    %p108 = scmp.ne.s32.totalorder %s94, %s95
    %p109 = scmp.eq.s32.totalorder %s19, 1
    %p110 = por %p108, %p109
    %p112 = scmp.ne.s32.totalorder %s95, %s111
    %p113 = scmp.eq.s32.totalorder %s19, 0
    %p114 = por %p112, %p113
    %s115 = ssub.s32 %s13, %s20
    %p116 = scmp.eq.s32.totalorder %s115, 0
    %s118 = sadd.s32 %s117, 1
    %s119 = scalar_select %p116, %s117, %s118
    %p122 = pneg %p116
    %p123 = scmp.eq.s32.totalorder %s13, 1
    %p124 = por %p122, %p123
    %p125 = scmp.ne.s32.totalorder %s117, %s120
    %p126 = scmp.eq.s32.totalorder %s13, 0
    %p127 = por %p125, %p126
    %p128 = scmp.ne.s32.totalorder %s117, %s120
    %p129 = scmp.eq.s32.totalorder %s18, 1
    %p130 = por %p128, %p129
    %p131 = scmp.ne.s32.totalorder %s120, %s121
    %p132 = scmp.eq.s32.totalorder %s18, 0
    %p133 = por %p131, %p132
    %p134 = scmp.ne.s32.totalorder %s120, %s121
    %p135 = scmp.eq.s32.totalorder %s19, 1
    %p136 = por %p134, %p135
    %p138 = scmp.ne.s32.totalorder %s121, %s137
    %p139 = scmp.eq.s32.totalorder %s19, 0
    %p140 = por %p138, %p139
    %s142 = sadd.s32 %s141, 1
    %p145 = scmp.eq.s32.totalorder %s13, 1
    %p146 = scmp.ne.s32.totalorder %s141, %s143
    %p147 = scmp.eq.s32.totalorder %s13, 0
    %p148 = por %p146, %p147
    %p149 = scmp.ne.s32.totalorder %s141, %s143
    %p150 = scmp.eq.s32.totalorder %s18, 1
    %p151 = por %p149, %p150
    %p152 = scmp.ne.s32.totalorder %s143, %s144
    %p153 = scmp.eq.s32.totalorder %s18, 0
    %p154 = por %p152, %p153
    %p155 = scmp.ne.s32.totalorder %s143, %s144
    %p156 = scmp.eq.s32.totalorder %s19, 1
    %p157 = por %p155, %p156
    %p159 = scmp.ne.s32.totalorder %s144, %s158
    %p160 = scmp.eq.s32.totalorder %s19, 0
    %p161 = por %p159, %p160
    %s163 = sadd.s32 %s162, 1
    %p166 = scmp.eq.s32.totalorder %s13, 1
    %p167 = scmp.ne.s32.totalorder %s162, %s164
    %p168 = scmp.eq.s32.totalorder %s13, 0
    %p169 = por %p167, %p168
    %p170 = scmp.ne.s32.totalorder %s162, %s164
    %p171 = scmp.eq.s32.totalorder %s18, 1
    %p172 = por %p170, %p171
    %p173 = scmp.ne.s32.totalorder %s164, %s165
    %p174 = scmp.eq.s32.totalorder %s18, 0
    %p175 = por %p173, %p174
    %p176 = scmp.ne.s32.totalorder %s164, %s165
    %p177 = scmp.eq.s32.totalorder %s19, 1
    %p178 = por %p176, %p177
    %p180 = scmp.ne.s32.totalorder %s165, %s179
    %p181 = scmp.eq.s32.totalorder %s19, 0
    %p182 = por %p180, %p181
    %p183 = scmp.le.s32.totalorder 1, %s13
    %p184 = scmp.lt.s32.totalorder %s13, 3
    %p185 = pnand %p183, %p184
    %p186 = pneg %p185
    // Predicated region
    $region9: #{resblock_forward.2} parent=5 // pred_check
      _
    $region10: #{resblock_forward.2} parent=5 // pred_check_branch
      %188 = sbr.rel (%p185) target = $region12
    $region11: #{resblock_forward.2} parent=5 // pred_region
      %s189 = ssub.s32 %s13, 1
      // Predicated region
      $region13: #{resblock_forward.2} parent=11 // pred_check
        %p190 = pneg %p60
      $region14: #{resblock_forward.2} parent=11 // pred_check_branch
        %192 = sbr.rel (%p190) target = $region16
      $region15: #{resblock_forward.2} parent=11 // pred_region
        _
      $region16: #{resblock_forward.2} parent=11 // pred_fallthru
        _
      // Predicated region
      $region17: #{resblock_forward.2} parent=11 // pred_check
        %p193 = pneg %p81
      $region18: #{resblock_forward.2} parent=11 // pred_check_branch
        %195 = sbr.rel (%p193) target = $region20
      $region19: #{resblock_forward.2} parent=11 // pred_region
        _
      $region20: #{resblock_forward.2} parent=11 // pred_fallthru
        _
    $region12: #{resblock_forward.2} parent=5 // pred_fallthru
      _
    %p196 = scmp.lt.s32.totalorder %s13, 2
    // Predicated region
    $region21: #{resblock_forward.2} parent=5 // pred_check
      %p197 = pneg %p196
    $region22: #{resblock_forward.2} parent=5 // pred_check_branch
      %199 = sbr.rel (%p197) target = $region24
    $region23: #{resblock_forward.2} parent=5 // pred_region
      // Predicated region
      $region25: #{resblock_forward.2} parent=23 // pred_check
        %p200 = pneg %p33
      $region26: #{resblock_forward.2} parent=23 // pred_check_branch
        %202 = sbr.rel (%p200) target = $region28
      $region27: #{resblock_forward.2} parent=23 // pred_region
        %s203 = smul.u32 32, %s13
        %p204 = scmp.lt.s32.totalorder %s203, 63
        %s205 = scalar_select %p204, %s203, 63
        %s206 = smul.addr %s205, 4
        %s207 = scalar_lea.vmem %s0, %s206
        %s208 = smul.u32 32, %s13
      $region28: #{resblock_forward.2} parent=23 // pred_fallthru
        _
    $region24: #{resblock_forward.2} parent=5 // pred_fallthru
      _
    %p209 = scmp.le.s32.totalorder 1, %s13
    %p210 = scmp.lt.s32.totalorder %s13, 3
    %p211 = pnand %p209, %p210
    %p212 = pneg %p211
    // Predicated region
    $region29: #{resblock_forward.2} parent=5 // pred_check
      _
    $region30: #{resblock_forward.2} parent=5 // pred_check_branch
      %214 = sbr.rel (%p211) target = $region32
    $region31: #{resblock_forward.2} parent=5 // pred_region
      %s215 = ssub.s32 %s13, 1
      %s216 = smul.u32 32, %s18
      %p217 = scmp.lt.s32.totalorder %s216, 63
      %s218 = scalar_select %p217, %s216, 63
      %s219 = smul.addr %s218, 4
      %s220 = scalar_lea.vmem %s0, %s219
      %p221 = pneg %p39
      %p222 = pneg %p36
      %p223 = pneg %p60
      %p224 = pneg %p57
      %p225 = pneg %p81
      %p226 = pneg %p78
      %p227 = pneg %p107
      %p228 = pneg %p104
      %s229 = smul.u32 32, %s18
      %p230 = scmp.lt.s32.totalorder %s229, 63
      %s231 = scalar_select %p230, %s229, 63
      %s232 = smul.addr %s231, 8
      %s233 = scalar_lea.vmem %s3, %s232
      %p234 = pneg %p133
      %p235 = pneg %p130
      %s236 = smul.u32 32, %s18
      %p237 = scmp.lt.s32.totalorder %s236, 63
      %s238 = scalar_select %p237, %s236, 63
      %s239 = smul.addr %s238, 8
      %s240 = scalar_lea.vmem %s4, %s239
      %p241 = pneg %p154
      %p242 = pneg %p151
      %p243 = pneg %p175
      %p244 = pneg %p172
      %s245 = smul.u32 32, %s18
      %p246 = scmp.lt.s32.totalorder %s245, 63
      %s247 = scalar_select %p246, %s245, 63
      %s248 = smul.addr %s247, 4
      %s249 = scalar_lea.vmem %s0, %s248
      %s250 = smul.u32 32, %s18
      %s251 = smul.u32 32, %s18
      %p252 = scmp.lt.s32.totalorder %s251, 63
      %s253 = scalar_select %p252, %s251, 63
      %s254 = smul.addr %s253, 8
      %s255 = scalar_lea.vmem %s3, %s254
      %s256 = smul.u32 32, %s18
      %s257 = smul.u32 32, %s18
      %p258 = scmp.lt.s32.totalorder %s257, 63
      %s259 = scalar_select %p258, %s257, 63
      %s260 = smul.addr %s259, 8
      %s261 = scalar_lea.vmem %s4, %s260
      %s262 = smul.u32 32, %s18
      %v264 = vld [vmem:[%s249] sm:$0xf]
      %v265 = vld [vmem:[%s249 + $0x4] sm:$0xf]
      %v266 = vld [vmem:[%s249 + $0x8] sm:$0xf]
      %v267 = vld [vmem:[%s249 + $0xc] sm:$0xf]
      %v268 = vld [vmem:[%s249 + $0x10] sm:$0xf]
      %v269 = vld [vmem:[%s249 + $0x14] sm:$0xf]
      %v270 = vld [vmem:[%s249 + $0x18] sm:$0xf]
      %v271 = vld [vmem:[%s249 + $0x1c] sm:$0xf]
      %v272 = vld [vmem:[%s249 + $0x20] sm:$0xf]
      %v273 = vld [vmem:[%s249 + $0x24] sm:$0xf]
      %v274 = vld [vmem:[%s249 + $0x28] sm:$0xf]
      %v275 = vld [vmem:[%s249 + $0x2c] sm:$0xf]
      %v276 = vld [vmem:[%s249 + $0x30] sm:$0xf]
      %v277 = vld [vmem:[%s249 + $0x34] sm:$0xf]
      %v278 = vld [vmem:[%s249 + $0x38] sm:$0xf]
      %v279 = vld [vmem:[%s249 + $0x3c] sm:$0xf]
      %v280 = vld [vmem:[%s249 + $0x40] sm:$0xf]
      %v281 = vld [vmem:[%s249 + $0x44] sm:$0xf]
      %v282 = vld [vmem:[%s249 + $0x48] sm:$0xf]
      %v283 = vld [vmem:[%s249 + $0x4c] sm:$0xf]
      %v284 = vld [vmem:[%s249 + $0x50] sm:$0xf]
      %v285 = vld [vmem:[%s249 + $0x54] sm:$0xf]
      %v286 = vld [vmem:[%s249 + $0x58] sm:$0xf]
      %v287 = vld [vmem:[%s249 + $0x5c] sm:$0xf]
      %v288 = vld [vmem:[%s249 + $0x60] sm:$0xf]
      %v289 = vld [vmem:[%s249 + $0x64] sm:$0xf]
      %v290 = vld [vmem:[%s249 + $0x68] sm:$0xf]
      %v291 = vld [vmem:[%s249 + $0x6c] sm:$0xf]
      %v292 = vld [vmem:[%s249 + $0x70] sm:$0xf]
      %v293 = vld [vmem:[%s249 + $0x74] sm:$0xf]
      %v294 = vld [vmem:[%s249 + $0x78] sm:$0xf]
      %v295 = vld [vmem:[%s249 + $0x7c] sm:$0xf]
      %v296 = vld [vmem:[%s1] sm:$0xf]
      %v297 = vld [vmem:[%s1 + $0x4] sm:$0xf]
      %v298 = vld [vmem:[%s1 + $0x8] sm:$0xf]
      %v299 = vld [vmem:[%s1 + $0xc] sm:$0xf]
      %v300 = vld [vmem:[%s1 + $0x10] sm:$0x3]
      %v301 = vld [vmem:[%s2] sm:$0x1]
      %v303 = vlaneseq
      %v304 = vshrl.u32 %v303, 7
      %v305 = vsub.s32 0, %v304
      %v306 = vrot.slane %v301, %v305
      %v340 = vunpack.c.l.b16 %v264
      %v341 = vunpack.c.l.b16 %v265
      %v342 = vunpack.c.l.b16 %v266
      %v343 = vunpack.c.l.b16 %v267
      %v344 = vunpack.c.l.b16 %v268
      %v345 = vunpack.c.l.b16 %v269
      %v346 = vunpack.c.l.b16 %v270
      %v347 = vunpack.c.l.b16 %v271
      %v348 = vunpack.c.l.b16 %v272
      %v349 = vunpack.c.l.b16 %v273
      %v350 = vunpack.c.l.b16 %v274
      %v351 = vunpack.c.l.b16 %v275
      %v352 = vunpack.c.l.b16 %v276
      %v353 = vunpack.c.l.b16 %v277
      %v354 = vunpack.c.l.b16 %v278
      %v355 = vunpack.c.l.b16 %v279
      %v356 = vunpack.c.l.b16 %v280
      %v357 = vunpack.c.l.b16 %v281
      %v358 = vunpack.c.l.b16 %v282
      %v359 = vunpack.c.l.b16 %v283
      %v360 = vunpack.c.l.b16 %v284
      %v361 = vunpack.c.l.b16 %v285
      %v362 = vunpack.c.l.b16 %v286
      %v363 = vunpack.c.l.b16 %v287
      %v364 = vunpack.c.l.b16 %v288
      %v365 = vunpack.c.l.b16 %v289
      %v366 = vunpack.c.l.b16 %v290
      %v367 = vunpack.c.l.b16 %v291
      %v368 = vunpack.c.l.b16 %v292
      %v369 = vunpack.c.l.b16 %v293
      %v370 = vunpack.c.l.b16 %v294
      %v371 = vunpack.c.l.b16 %v295
      %v372 = vpack.c.b16 %v341, %v340
      %v373 = vpack.c.b16 %v343, %v342
      %v374 = vpack.c.b16 %v345, %v344
      %v375 = vpack.c.b16 %v347, %v346
      %v376 = vpack.c.b16 %v349, %v348
      %v377 = vpack.c.b16 %v351, %v350
      %v378 = vpack.c.b16 %v353, %v352
      %v379 = vpack.c.b16 %v355, %v354
      %v380 = vpack.c.b16 %v357, %v356
      %v381 = vpack.c.b16 %v359, %v358
      %v382 = vpack.c.b16 %v361, %v360
      %v383 = vpack.c.b16 %v363, %v362
      %v384 = vpack.c.b16 %v365, %v364
      %v385 = vpack.c.b16 %v367, %v366
      %v386 = vpack.c.b16 %v369, %v368
      %v387 = vpack.c.b16 %v371, %v370
      %v393 = vunpack.c.l.b16 %v296
      %v394 = vunpack.c.l.b16 %v297
      %v395 = vunpack.c.l.b16 %v298
      %v396 = vunpack.c.l.b16 %v299
      %v397 = vunpack.c.l.b16 %v300
      %v398 = vpack.c.b16 %v394, %v393
      %v399 = vpack.c.b16 %v396, %v395
      %v400 = vpack.c.b16 %v397, %v397
      %vm403 = vcmask 293888
      %v405 = vsel %vm403, %v372, 0
      %v408 = vsel %vm403, %v373, 0
      %v411 = vsel %vm403, %v374, 0
      %v414 = vsel %vm403, %v375, 0
      %v417 = vsel %vm403, %v376, 0
      %v420 = vsel %vm403, %v377, 0
      %v423 = vsel %vm403, %v378, 0
      %v426 = vsel %vm403, %v379, 0
      %v429 = vsel %vm403, %v380, 0
      %v432 = vsel %vm403, %v381, 0
      %v435 = vsel %vm403, %v382, 0
      %v438 = vsel %vm403, %v383, 0
      %v441 = vsel %vm403, %v384, 0
      %v444 = vsel %vm403, %v385, 0
      %v447 = vsel %vm403, %v386, 0
      %v450 = vsel %vm403, %v387, 0
      %vm452 = vcmask 1041408
      %v454 = vsel %vm452, %v400, 0
      %456 = vmatprep.subr.bf16.mxu0 0
      %457 = vmatpush1.bf16.msra.mxu0 %v398
      %458 = vmatprep.subr.bf16.mxu0 0
      %459 = vmatpush1.bf16.msra.mxu0 %v399
      %460 = vmatprep.subr.bf16.mxu0 0
      %461 = vmatpush1.bf16.msra.mxu0 %v454
      %462 = vmatprep.subr.bf16.mxu0 0
      %463 = vmatpush1.bf16.msra.mxu0 0
      %464 = vmatprep.subr.bf16.mxu0 0
      %465 = vmatpush1.bf16.msra.mxu0 0
      %466 = vmatprep.subr.bf16.mxu0 0
      %467 = vmatpush1.bf16.msra.mxu0 0
      %468 = vmatprep.subr.bf16.mxu0 0
      %469 = vmatpush1.bf16.msra.mxu0 0
      %470 = vmatprep.subr.bf16.mxu0 0
      %471 = vmatpush1.bf16.msra.mxu0 0
      %472 = vmatprep.subr.bf16.mxu0 0
      %473 = vmatpush1.bf16.msra.mxu0 0
      %474 = vmatprep.subr.bf16.mxu0 0
      %475 = vmatpush1.bf16.msra.mxu0 0
      %476 = vmatprep.subr.bf16.mxu0 0
      %477 = vmatpush1.bf16.msra.mxu0 0
      %478 = vmatprep.subr.bf16.mxu0 0
      %479 = vmatpush1.bf16.msra.mxu0 0
      %480 = vmatprep.subr.bf16.mxu0 0
      %481 = vmatpush1.bf16.msra.mxu0 0
      %482 = vmatprep.subr.bf16.mxu0 0
      %483 = vmatpush1.bf16.msra.mxu0 0
      %484 = vmatprep.subr.bf16.mxu0 0
      %485 = vmatpush1.bf16.msra.mxu0 0
      %486 = vmatprep.subr.bf16.mxu0 0
      %487 = vmatpush1.bf16.msra.mxu0 0
      %488 = vmatprep.mubr.bf16.mxu0 0
      %489 = vmatmul.mubr.bf16.gmra.mrb[0].mxu0 %v405
      %v490 = vpop.f32.mrb[0].mxu0
      %v491 = vadd.f32 %v306, %v490
      %v492 = vpop.f32.mrb[0].mxu0
      %v493 = vpop.f32.mrb[0].mxu0
      %v494 = vadd.f32 %v306, %v493
      %v495 = vpop.f32.mrb[0].mxu0
      %496 = vmatprep.mubr.bf16.mxu0 0
      %497 = vmatmul.mubr.bf16.gmra.mrb[0].mxu0 %v408
      %v498 = vpop.f32.mrb[0].mxu0
      %v499 = vadd.f32 %v306, %v498
      %v500 = vpop.f32.mrb[0].mxu0
      %v501 = vpop.f32.mrb[0].mxu0
      %v502 = vadd.f32 %v306, %v501
      %v503 = vpop.f32.mrb[0].mxu0
      %504 = vmatprep.mubr.bf16.mxu0 0
      %505 = vmatmul.mubr.bf16.gmra.mrb[0].mxu0 %v411
      %v506 = vpop.f32.mrb[0].mxu0
      %v507 = vadd.f32 %v306, %v506
      %v508 = vpop.f32.mrb[0].mxu0
      %v509 = vpop.f32.mrb[0].mxu0
      %v510 = vadd.f32 %v306, %v509
      %v511 = vpop.f32.mrb[0].mxu0
      %512 = vmatprep.mubr.bf16.mxu0 0
      %513 = vmatmul.mubr.bf16.gmra.mrb[0].mxu0 %v414
      %v514 = vpop.f32.mrb[0].mxu0
      %v515 = vadd.f32 %v306, %v514
      %v516 = vpop.f32.mrb[0].mxu0
      %v517 = vpop.f32.mrb[0].mxu0
      %v518 = vadd.f32 %v306, %v517
      %v519 = vpop.f32.mrb[0].mxu0
      %520 = vmatprep.mubr.bf16.mxu0 0
      %521 = vmatmul.mubr.bf16.gmra.mrb[0].mxu0 %v417
      %v522 = vpop.f32.mrb[0].mxu0
      %v523 = vadd.f32 %v306, %v522
      %v524 = vpop.f32.mrb[0].mxu0
      %v525 = vpop.f32.mrb[0].mxu0
      %v526 = vadd.f32 %v306, %v525
      %v527 = vpop.f32.mrb[0].mxu0
      %528 = vmatprep.mubr.bf16.mxu0 0
      %529 = vmatmul.mubr.bf16.gmra.mrb[0].mxu0 %v420
      %v530 = vpop.f32.mrb[0].mxu0
      %v531 = vadd.f32 %v306, %v530
      %v532 = vpop.f32.mrb[0].mxu0
      %v533 = vpop.f32.mrb[0].mxu0
      %v534 = vadd.f32 %v306, %v533
      %v535 = vpop.f32.mrb[0].mxu0
      %536 = vmatprep.mubr.bf16.mxu0 0
      %537 = vmatmul.mubr.bf16.gmra.mrb[0].mxu0 %v423
      %v538 = vpop.f32.mrb[0].mxu0
      %v539 = vadd.f32 %v306, %v538
      %v540 = vpop.f32.mrb[0].mxu0
      %v541 = vpop.f32.mrb[0].mxu0
      %v542 = vadd.f32 %v306, %v541
      %v543 = vpop.f32.mrb[0].mxu0
      %544 = vmatprep.mubr.bf16.mxu0 0
      %545 = vmatmul.mubr.bf16.gmra.mrb[0].mxu0 %v426
      %v546 = vpop.f32.mrb[0].mxu0
      %v547 = vadd.f32 %v306, %v546
      %v548 = vpop.f32.mrb[0].mxu0
      %v549 = vpop.f32.mrb[0].mxu0
      %v550 = vadd.f32 %v306, %v549
      %v551 = vpop.f32.mrb[0].mxu0
      %552 = vmatprep.mubr.bf16.mxu0 0
      %553 = vmatmul.mubr.bf16.gmra.mrb[0].mxu0 %v429
      %v554 = vpop.f32.mrb[0].mxu0
      %v555 = vadd.f32 %v306, %v554
      %v556 = vpop.f32.mrb[0].mxu0
      %v557 = vpop.f32.mrb[0].mxu0
      %v558 = vadd.f32 %v306, %v557
      %v559 = vpop.f32.mrb[0].mxu0
      %560 = vmatprep.mubr.bf16.mxu0 0
      %561 = vmatmul.mubr.bf16.gmra.mrb[0].mxu0 %v432
      %v562 = vpop.f32.mrb[0].mxu0
      %v563 = vadd.f32 %v306, %v562
      %v564 = vpop.f32.mrb[0].mxu0
      %v565 = vpop.f32.mrb[0].mxu0
      %v566 = vadd.f32 %v306, %v565
      %v567 = vpop.f32.mrb[0].mxu0
      %568 = vmatprep.mubr.bf16.mxu0 0
      %569 = vmatmul.mubr.bf16.gmra.mrb[0].mxu0 %v435
      %v570 = vpop.f32.mrb[0].mxu0
      %v571 = vadd.f32 %v306, %v570
      %v572 = vpop.f32.mrb[0].mxu0
      %v573 = vpop.f32.mrb[0].mxu0
      %v574 = vadd.f32 %v306, %v573
      %v575 = vpop.f32.mrb[0].mxu0
      %576 = vmatprep.mubr.bf16.mxu0 0
      %577 = vmatmul.mubr.bf16.gmra.mrb[0].mxu0 %v438
      %v578 = vpop.f32.mrb[0].mxu0
      %v579 = vadd.f32 %v306, %v578
      %v580 = vpop.f32.mrb[0].mxu0
      %v581 = vpop.f32.mrb[0].mxu0
      %v582 = vadd.f32 %v306, %v581
      %v583 = vpop.f32.mrb[0].mxu0
      %584 = vmatprep.mubr.bf16.mxu0 0
      %585 = vmatmul.mubr.bf16.gmra.mrb[0].mxu0 %v441
      %v586 = vpop.f32.mrb[0].mxu0
      %v587 = vadd.f32 %v306, %v586
      %v588 = vpop.f32.mrb[0].mxu0
      %v589 = vpop.f32.mrb[0].mxu0
      %v590 = vadd.f32 %v306, %v589
      %v591 = vpop.f32.mrb[0].mxu0
      %592 = vmatprep.mubr.bf16.mxu0 0
      %593 = vmatmul.mubr.bf16.gmra.mrb[0].mxu0 %v444
      %v594 = vpop.f32.mrb[0].mxu0
      %v595 = vadd.f32 %v306, %v594
      %v596 = vpop.f32.mrb[0].mxu0
      %v597 = vpop.f32.mrb[0].mxu0
      %v598 = vadd.f32 %v306, %v597
      %v599 = vpop.f32.mrb[0].mxu0
      %600 = vmatprep.mubr.bf16.mxu0 0
      %601 = vmatmul.mubr.bf16.gmra.mrb[0].mxu0 %v447
      %v602 = vpop.f32.mrb[0].mxu0
      %v603 = vadd.f32 %v306, %v602
      %v604 = vpop.f32.mrb[0].mxu0
      %v605 = vpop.f32.mrb[0].mxu0
      %v606 = vadd.f32 %v306, %v605
      %v607 = vpop.f32.mrb[0].mxu0
      %608 = vmatprep.mubr.bf16.mxu0 0
      %609 = vmatmul.mubr.bf16.gmra.mrb[0].mxu0 %v450
      %v610 = vpop.f32.mrb[0].mxu0
      %v611 = vadd.f32 %v306, %v610
      %v612 = vpop.f32.mrb[0].mxu0
      %v613 = vpop.f32.mrb[0].mxu0
      %v614 = vadd.f32 %v306, %v613
      %v615 = vpop.f32.mrb[0].mxu0
      %616 = vdwg.mxu0
      %vm617 = vcmp.gt.f32.partialorder %v491, 0.0
      %vm618 = vcmp.gt.f32.partialorder %v494, 0.0
      %vm619 = vcmp.gt.f32.partialorder %v499, 0.0
      %vm620 = vcmp.gt.f32.partialorder %v502, 0.0
      %vm621 = vcmp.gt.f32.partialorder %v507, 0.0
      %vm622 = vcmp.gt.f32.partialorder %v510, 0.0
      %vm623 = vcmp.gt.f32.partialorder %v515, 0.0
      %vm624 = vcmp.gt.f32.partialorder %v518, 0.0
      %vm625 = vcmp.gt.f32.partialorder %v523, 0.0
      %vm626 = vcmp.gt.f32.partialorder %v526, 0.0
      %vm627 = vcmp.gt.f32.partialorder %v531, 0.0
      %vm628 = vcmp.gt.f32.partialorder %v534, 0.0
      %vm629 = vcmp.gt.f32.partialorder %v539, 0.0
      %vm630 = vcmp.gt.f32.partialorder %v542, 0.0
      %vm631 = vcmp.gt.f32.partialorder %v547, 0.0
      %vm632 = vcmp.gt.f32.partialorder %v550, 0.0
      %vm633 = vcmp.gt.f32.partialorder %v555, 0.0
      %vm634 = vcmp.gt.f32.partialorder %v558, 0.0
      %vm635 = vcmp.gt.f32.partialorder %v563, 0.0
      %vm636 = vcmp.gt.f32.partialorder %v566, 0.0
      %vm637 = vcmp.gt.f32.partialorder %v571, 0.0
      %vm638 = vcmp.gt.f32.partialorder %v574, 0.0
      %vm639 = vcmp.gt.f32.partialorder %v579, 0.0
      %vm640 = vcmp.gt.f32.partialorder %v582, 0.0
      %vm641 = vcmp.gt.f32.partialorder %v587, 0.0
      %vm642 = vcmp.gt.f32.partialorder %v590, 0.0
      %vm643 = vcmp.gt.f32.partialorder %v595, 0.0
      %vm644 = vcmp.gt.f32.partialorder %v598, 0.0
      %vm645 = vcmp.gt.f32.partialorder %v603, 0.0
      %vm646 = vcmp.gt.f32.partialorder %v606, 0.0
      %vm647 = vcmp.gt.f32.partialorder %v611, 0.0
      %vm648 = vcmp.gt.f32.partialorder %v614, 0.0
      %v649 = vmul.f32 %v491, 0.01
      %v650 = vmul.f32 %v494, 0.01
      %v651 = vmul.f32 %v499, 0.01
      %v652 = vmul.f32 %v502, 0.01
      %v653 = vmul.f32 %v507, 0.01
      %v654 = vmul.f32 %v510, 0.01
      %v655 = vmul.f32 %v515, 0.01
      %v656 = vmul.f32 %v518, 0.01
      %v657 = vmul.f32 %v523, 0.01
      %v658 = vmul.f32 %v526, 0.01
      %v659 = vmul.f32 %v531, 0.01
      %v660 = vmul.f32 %v534, 0.01
      %v661 = vmul.f32 %v539, 0.01
      %v662 = vmul.f32 %v542, 0.01
      %v663 = vmul.f32 %v547, 0.01
      %v664 = vmul.f32 %v550, 0.01
      %v665 = vmul.f32 %v555, 0.01
      %v666 = vmul.f32 %v558, 0.01
      %v667 = vmul.f32 %v563, 0.01
      %v668 = vmul.f32 %v566, 0.01
      %v669 = vmul.f32 %v571, 0.01
      %v670 = vmul.f32 %v574, 0.01
      %v671 = vmul.f32 %v579, 0.01
      %v672 = vmul.f32 %v582, 0.01
      %v673 = vmul.f32 %v587, 0.01
      %v674 = vmul.f32 %v590, 0.01
      %v675 = vmul.f32 %v595, 0.01
      %v676 = vmul.f32 %v598, 0.01
      %v677 = vmul.f32 %v603, 0.01
      %v678 = vmul.f32 %v606, 0.01
      %v679 = vmul.f32 %v611, 0.01
      %v680 = vmul.f32 %v614, 0.01
      %v681 = vsel %vm617, %v491, %v649
      %v682 = vsel %vm618, %v494, %v650
      %v683 = vsel %vm619, %v499, %v651
      %v684 = vsel %vm620, %v502, %v652
      %v685 = vsel %vm621, %v507, %v653
      %v686 = vsel %vm622, %v510, %v654
      %v687 = vsel %vm623, %v515, %v655
      %v688 = vsel %vm624, %v518, %v656
      %v689 = vsel %vm625, %v523, %v657
      %v690 = vsel %vm626, %v526, %v658
      %v691 = vsel %vm627, %v531, %v659
      %v692 = vsel %vm628, %v534, %v660
      %v693 = vsel %vm629, %v539, %v661
      %v694 = vsel %vm630, %v542, %v662
      %v695 = vsel %vm631, %v547, %v663
      %v696 = vsel %vm632, %v550, %v664
      %v697 = vsel %vm633, %v555, %v665
      %v698 = vsel %vm634, %v558, %v666
      %v699 = vsel %vm635, %v563, %v667
      %v700 = vsel %vm636, %v566, %v668
      %v701 = vsel %vm637, %v571, %v669
      %v702 = vsel %vm638, %v574, %v670
      %v703 = vsel %vm639, %v579, %v671
      %v704 = vsel %vm640, %v582, %v672
      %v705 = vsel %vm641, %v587, %v673
      %v706 = vsel %vm642, %v590, %v674
      %v707 = vsel %vm643, %v595, %v675
      %v708 = vsel %vm644, %v598, %v676
      %v709 = vsel %vm645, %v603, %v677
      %v710 = vsel %vm646, %v606, %v678
      %v711 = vsel %vm647, %v611, %v679
      %v712 = vsel %vm648, %v614, %v680
      %vm713 = vcmask 64512
      %714 = vst.msk [vmem:[%s255] sm:$0xff] %vm713, %v681
      %715 = vst.msk [vmem:[%s255 + $0x8] sm:$0xff] %vm713, %v682
      %716 = vst.msk [vmem:[%s255 + $0x10] sm:$0xff] %vm713, %v683
      %717 = vst.msk [vmem:[%s255 + $0x18] sm:$0xff] %vm713, %v684
      %718 = vst.msk [vmem:[%s255 + $0x20] sm:$0xff] %vm713, %v685
      %719 = vst.msk [vmem:[%s255 + $0x28] sm:$0xff] %vm713, %v686
      %720 = vst.msk [vmem:[%s255 + $0x30] sm:$0xff] %vm713, %v687
      %721 = vst.msk [vmem:[%s255 + $0x38] sm:$0xff] %vm713, %v688
      %722 = vst.msk [vmem:[%s255 + $0x40] sm:$0xff] %vm713, %v689
      %723 = vst.msk [vmem:[%s255 + $0x48] sm:$0xff] %vm713, %v690
      %724 = vst.msk [vmem:[%s255 + $0x50] sm:$0xff] %vm713, %v691
      %725 = vst.msk [vmem:[%s255 + $0x58] sm:$0xff] %vm713, %v692
      %726 = vst.msk [vmem:[%s255 + $0x60] sm:$0xff] %vm713, %v693
      %727 = vst.msk [vmem:[%s255 + $0x68] sm:$0xff] %vm713, %v694
      %728 = vst.msk [vmem:[%s255 + $0x70] sm:$0xff] %vm713, %v695
      %729 = vst.msk [vmem:[%s255 + $0x78] sm:$0xff] %vm713, %v696
      %730 = vst.msk [vmem:[%s255 + $0x80] sm:$0xff] %vm713, %v697
      %731 = vst.msk [vmem:[%s255 + $0x88] sm:$0xff] %vm713, %v698
      %732 = vst.msk [vmem:[%s255 + $0x90] sm:$0xff] %vm713, %v699
      %733 = vst.msk [vmem:[%s255 + $0x98] sm:$0xff] %vm713, %v700
      %734 = vst.msk [vmem:[%s255 + $0xa0] sm:$0xff] %vm713, %v701
      %735 = vst.msk [vmem:[%s255 + $0xa8] sm:$0xff] %vm713, %v702
      %736 = vst.msk [vmem:[%s255 + $0xb0] sm:$0xff] %vm713, %v703
      %737 = vst.msk [vmem:[%s255 + $0xb8] sm:$0xff] %vm713, %v704
      %738 = vst.msk [vmem:[%s255 + $0xc0] sm:$0xff] %vm713, %v705
      %739 = vst.msk [vmem:[%s255 + $0xc8] sm:$0xff] %vm713, %v706
      %740 = vst.msk [vmem:[%s255 + $0xd0] sm:$0xff] %vm713, %v707
      %741 = vst.msk [vmem:[%s255 + $0xd8] sm:$0xff] %vm713, %v708
      %742 = vst.msk [vmem:[%s255 + $0xe0] sm:$0xff] %vm713, %v709
      %743 = vst.msk [vmem:[%s255 + $0xe8] sm:$0xff] %vm713, %v710
      %744 = vst.msk [vmem:[%s255 + $0xf0] sm:$0xff] %vm713, %v711
      %745 = vst.msk [vmem:[%s255 + $0xf8] sm:$0xff] %vm713, %v712
      %778 = vrot.lane.b32.xlu0 %v681, 120
      %v779 = vpop.permute.xlu0 %778
      %780 = vrot.lane.b32.xlu0 %v682, 120
      %v781 = vpop.permute.xlu0 %780
      %782 = vrot.lane.b32.xlu0 %v683, 120
      %v783 = vpop.permute.xlu0 %782
      %784 = vrot.lane.b32.xlu0 %v684, 120
      %v785 = vpop.permute.xlu0 %784
      %786 = vrot.lane.b32.xlu0 %v685, 120
      %v787 = vpop.permute.xlu0 %786
      %788 = vrot.lane.b32.xlu0 %v686, 120
      %v789 = vpop.permute.xlu0 %788
      %790 = vrot.lane.b32.xlu0 %v687, 120
      %v791 = vpop.permute.xlu0 %790
      %792 = vrot.lane.b32.xlu0 %v688, 120
      %v793 = vpop.permute.xlu0 %792
      %794 = vrot.lane.b32.xlu0 %v689, 120
      %v795 = vpop.permute.xlu0 %794
      %796 = vrot.lane.b32.xlu0 %v690, 120
      %v797 = vpop.permute.xlu0 %796
      %798 = vrot.lane.b32.xlu0 %v691, 120
      %v799 = vpop.permute.xlu0 %798
      %800 = vrot.lane.b32.xlu0 %v692, 120
      %v801 = vpop.permute.xlu0 %800
      %802 = vrot.lane.b32.xlu0 %v693, 120
      %v803 = vpop.permute.xlu0 %802
      %804 = vrot.lane.b32.xlu0 %v694, 120
      %v805 = vpop.permute.xlu0 %804
      %806 = vrot.lane.b32.xlu0 %v695, 120
      %v807 = vpop.permute.xlu0 %806
      %808 = vrot.lane.b32.xlu0 %v696, 120
      %v809 = vpop.permute.xlu0 %808
      %810 = vrot.lane.b32.xlu0 %v697, 120
      %v811 = vpop.permute.xlu0 %810
      %812 = vrot.lane.b32.xlu0 %v698, 120
      %v813 = vpop.permute.xlu0 %812
      %814 = vrot.lane.b32.xlu0 %v699, 120
      %v815 = vpop.permute.xlu0 %814
      %816 = vrot.lane.b32.xlu0 %v700, 120
      %v817 = vpop.permute.xlu0 %816
      %818 = vrot.lane.b32.xlu0 %v701, 120
      %v819 = vpop.permute.xlu0 %818
      %820 = vrot.lane.b32.xlu0 %v702, 120
      %v821 = vpop.permute.xlu0 %820
      %822 = vrot.lane.b32.xlu0 %v703, 120
      %v823 = vpop.permute.xlu0 %822
      %824 = vrot.lane.b32.xlu0 %v704, 120
      %v825 = vpop.permute.xlu0 %824
      %826 = vrot.lane.b32.xlu0 %v705, 120
      %v827 = vpop.permute.xlu0 %826
      %828 = vrot.lane.b32.xlu0 %v706, 120
      %v829 = vpop.permute.xlu0 %828
      %830 = vrot.lane.b32.xlu0 %v707, 120
      %v831 = vpop.permute.xlu0 %830
      %832 = vrot.lane.b32.xlu0 %v708, 120
      %v833 = vpop.permute.xlu0 %832
      %834 = vrot.lane.b32.xlu0 %v709, 120
      %v835 = vpop.permute.xlu0 %834
      %836 = vrot.lane.b32.xlu0 %v710, 120
      %v837 = vpop.permute.xlu0 %836
      %838 = vrot.lane.b32.xlu0 %v711, 120
      %v839 = vpop.permute.xlu0 %838
      %840 = vrot.lane.b32.xlu0 %v712, 120
      %v841 = vpop.permute.xlu0 %840
      %874 = vst.msk [vmem:[%s261] sm:$0xff] %vm713, %v779
      %875 = vst.msk [vmem:[%s261 + $0x8] sm:$0xff] %vm713, %v781
      %876 = vst.msk [vmem:[%s261 + $0x10] sm:$0xff] %vm713, %v783
      %877 = vst.msk [vmem:[%s261 + $0x18] sm:$0xff] %vm713, %v785
      %878 = vst.msk [vmem:[%s261 + $0x20] sm:$0xff] %vm713, %v787
      %879 = vst.msk [vmem:[%s261 + $0x28] sm:$0xff] %vm713, %v789
      %880 = vst.msk [vmem:[%s261 + $0x30] sm:$0xff] %vm713, %v791
      %881 = vst.msk [vmem:[%s261 + $0x38] sm:$0xff] %vm713, %v793
      %882 = vst.msk [vmem:[%s261 + $0x40] sm:$0xff] %vm713, %v795
      %883 = vst.msk [vmem:[%s261 + $0x48] sm:$0xff] %vm713, %v797
      %884 = vst.msk [vmem:[%s261 + $0x50] sm:$0xff] %vm713, %v799
      %885 = vst.msk [vmem:[%s261 + $0x58] sm:$0xff] %vm713, %v801
      %886 = vst.msk [vmem:[%s261 + $0x60] sm:$0xff] %vm713, %v803
      %887 = vst.msk [vmem:[%s261 + $0x68] sm:$0xff] %vm713, %v805
      %888 = vst.msk [vmem:[%s261 + $0x70] sm:$0xff] %vm713, %v807
      %889 = vst.msk [vmem:[%s261 + $0x78] sm:$0xff] %vm713, %v809
      %890 = vst.msk [vmem:[%s261 + $0x80] sm:$0xff] %vm713, %v811
      %891 = vst.msk [vmem:[%s261 + $0x88] sm:$0xff] %vm713, %v813
      %892 = vst.msk [vmem:[%s261 + $0x90] sm:$0xff] %vm713, %v815
      %893 = vst.msk [vmem:[%s261 + $0x98] sm:$0xff] %vm713, %v817
      %894 = vst.msk [vmem:[%s261 + $0xa0] sm:$0xff] %vm713, %v819
      %895 = vst.msk [vmem:[%s261 + $0xa8] sm:$0xff] %vm713, %v821
      %896 = vst.msk [vmem:[%s261 + $0xb0] sm:$0xff] %vm713, %v823
      %897 = vst.msk [vmem:[%s261 + $0xb8] sm:$0xff] %vm713, %v825
      %898 = vst.msk [vmem:[%s261 + $0xc0] sm:$0xff] %vm713, %v827
      %899 = vst.msk [vmem:[%s261 + $0xc8] sm:$0xff] %vm713, %v829
      %900 = vst.msk [vmem:[%s261 + $0xd0] sm:$0xff] %vm713, %v831
      %901 = vst.msk [vmem:[%s261 + $0xd8] sm:$0xff] %vm713, %v833
      %902 = vst.msk [vmem:[%s261 + $0xe0] sm:$0xff] %vm713, %v835
      %903 = vst.msk [vmem:[%s261 + $0xe8] sm:$0xff] %vm713, %v837
      %904 = vst.msk [vmem:[%s261 + $0xf0] sm:$0xff] %vm713, %v839
      %905 = vst.msk [vmem:[%s261 + $0xf8] sm:$0xff] %vm713, %v841
      %v906 = vsel %vm713, %v681, 0.0
      %v907 = vsel %vm713, %v682, 0.0
      %v908 = vadd.f32 %v906, %v907
      %v909 = vsel %vm713, %v683, 0.0
      %v910 = vadd.f32 %v908, %v909
      %v911 = vsel %vm713, %v684, 0.0
      %v912 = vadd.f32 %v910, %v911
      %v913 = vsel %vm713, %v685, 0.0
      %v914 = vadd.f32 %v912, %v913
      %v915 = vsel %vm713, %v686, 0.0
      %v916 = vadd.f32 %v914, %v915
      %v917 = vsel %vm713, %v687, 0.0
      %v918 = vadd.f32 %v916, %v917
      %v919 = vsel %vm713, %v688, 0.0
      %v920 = vadd.f32 %v918, %v919
      %v921 = vsel %vm713, %v689, 0.0
      %v922 = vadd.f32 %v920, %v921
      %v923 = vsel %vm713, %v690, 0.0
      %v924 = vadd.f32 %v922, %v923
      %v925 = vsel %vm713, %v691, 0.0
      %v926 = vadd.f32 %v924, %v925
      %v927 = vsel %vm713, %v692, 0.0
      %v928 = vadd.f32 %v926, %v927
      %v929 = vsel %vm713, %v693, 0.0
      %v930 = vadd.f32 %v928, %v929
      %v931 = vsel %vm713, %v694, 0.0
      %v932 = vadd.f32 %v930, %v931
      %v933 = vsel %vm713, %v695, 0.0
      %v934 = vadd.f32 %v932, %v933
      %v935 = vsel %vm713, %v696, 0.0
      %v936 = vadd.f32 %v934, %v935
      %v937 = vsel %vm713, %v697, 0.0
      %v938 = vadd.f32 %v936, %v937
      %v939 = vsel %vm713, %v698, 0.0
      %v940 = vadd.f32 %v938, %v939
      %v941 = vsel %vm713, %v699, 0.0
      %v942 = vadd.f32 %v940, %v941
      %v943 = vsel %vm713, %v700, 0.0
      %v944 = vadd.f32 %v942, %v943
      %v945 = vsel %vm713, %v701, 0.0
      %v946 = vadd.f32 %v944, %v945
      %v947 = vsel %vm713, %v702, 0.0
      %v948 = vadd.f32 %v946, %v947
      %v949 = vsel %vm713, %v703, 0.0
      %v950 = vadd.f32 %v948, %v949
      %v951 = vsel %vm713, %v704, 0.0
      %v952 = vadd.f32 %v950, %v951
      %v953 = vsel %vm713, %v705, 0.0
      %v954 = vadd.f32 %v952, %v953
      %v955 = vsel %vm713, %v706, 0.0
      %v956 = vadd.f32 %v954, %v955
      %v957 = vsel %vm713, %v707, 0.0
      %v958 = vadd.f32 %v956, %v957
      %v959 = vsel %vm713, %v708, 0.0
      %v960 = vadd.f32 %v958, %v959
      %v961 = vsel %vm713, %v709, 0.0
      %v962 = vadd.f32 %v960, %v961
      %v963 = vsel %vm713, %v710, 0.0
      %v964 = vadd.f32 %v962, %v963
      %v965 = vsel %vm713, %v711, 0.0
      %v966 = vadd.f32 %v964, %v965
      %v967 = vsel %vm713, %v712, 0.0
      %v968 = vadd.f32 %v966, %v967
      %v969 = vrot.slane %v968, 4
      %v970 = vadd.f32 %v968, %v969
      %v971 = vrot.slane %v970, 2
      %v972 = vadd.f32 %v970, %v971
      %v973 = vrot.slane %v972, 1
      %v974 = vadd.f32 %v972, %v973
      %v975 = vmul.f32 %v681, %v681
      %v976 = vmul.f32 %v682, %v682
      %v977 = vmul.f32 %v683, %v683
      %v978 = vmul.f32 %v684, %v684
      %v979 = vmul.f32 %v685, %v685
      %v980 = vmul.f32 %v686, %v686
      %v981 = vmul.f32 %v687, %v687
      %v982 = vmul.f32 %v688, %v688
      %v983 = vmul.f32 %v689, %v689
      %v984 = vmul.f32 %v690, %v690
      %v985 = vmul.f32 %v691, %v691
      %v986 = vmul.f32 %v692, %v692
      %v987 = vmul.f32 %v693, %v693
      %v988 = vmul.f32 %v694, %v694
      %v989 = vmul.f32 %v695, %v695
      %v990 = vmul.f32 %v696, %v696
      %v991 = vmul.f32 %v697, %v697
      %v992 = vmul.f32 %v698, %v698
      %v993 = vmul.f32 %v699, %v699
      %v994 = vmul.f32 %v700, %v700
      %v995 = vmul.f32 %v701, %v701
      %v996 = vmul.f32 %v702, %v702
      %v997 = vmul.f32 %v703, %v703
      %v998 = vmul.f32 %v704, %v704
      %v999 = vmul.f32 %v705, %v705
      %v1000 = vmul.f32 %v706, %v706
      %v1001 = vmul.f32 %v707, %v707
      %v1002 = vmul.f32 %v708, %v708
      %v1003 = vmul.f32 %v709, %v709
      %v1004 = vmul.f32 %v710, %v710
      %v1005 = vmul.f32 %v711, %v711
      %v1006 = vmul.f32 %v712, %v712
      %v1007 = vsel %vm713, %v975, 0.0
      %v1008 = vsel %vm713, %v976, 0.0
      %v1009 = vadd.f32 %v1007, %v1008
      %v1010 = vsel %vm713, %v977, 0.0
      %v1011 = vadd.f32 %v1009, %v1010
      %v1012 = vsel %vm713, %v978, 0.0
      %v1013 = vadd.f32 %v1011, %v1012
      %v1014 = vsel %vm713, %v979, 0.0
      %v1015 = vadd.f32 %v1013, %v1014
      %v1016 = vsel %vm713, %v980, 0.0
      %v1017 = vadd.f32 %v1015, %v1016
      %v1018 = vsel %vm713, %v981, 0.0
      %v1019 = vadd.f32 %v1017, %v1018
      %v1020 = vsel %vm713, %v982, 0.0
      %v1021 = vadd.f32 %v1019, %v1020
      %v1022 = vsel %vm713, %v983, 0.0
      %v1023 = vadd.f32 %v1021, %v1022
      %v1024 = vsel %vm713, %v984, 0.0
      %v1025 = vadd.f32 %v1023, %v1024
      %v1026 = vsel %vm713, %v985, 0.0
      %v1027 = vadd.f32 %v1025, %v1026
      %v1028 = vsel %vm713, %v986, 0.0
      %v1029 = vadd.f32 %v1027, %v1028
      %v1030 = vsel %vm713, %v987, 0.0
      %v1031 = vadd.f32 %v1029, %v1030
      %v1032 = vsel %vm713, %v988, 0.0
      %v1033 = vadd.f32 %v1031, %v1032
      %v1034 = vsel %vm713, %v989, 0.0
      %v1035 = vadd.f32 %v1033, %v1034
      %v1036 = vsel %vm713, %v990, 0.0
      %v1037 = vadd.f32 %v1035, %v1036
      %v1038 = vsel %vm713, %v991, 0.0
      %v1039 = vadd.f32 %v1037, %v1038
      %v1040 = vsel %vm713, %v992, 0.0
      %v1041 = vadd.f32 %v1039, %v1040
      %v1042 = vsel %vm713, %v993, 0.0
      %v1043 = vadd.f32 %v1041, %v1042
      %v1044 = vsel %vm713, %v994, 0.0
      %v1045 = vadd.f32 %v1043, %v1044
      %v1046 = vsel %vm713, %v995, 0.0
      %v1047 = vadd.f32 %v1045, %v1046
      %v1048 = vsel %vm713, %v996, 0.0
      %v1049 = vadd.f32 %v1047, %v1048
      %v1050 = vsel %vm713, %v997, 0.0
      %v1051 = vadd.f32 %v1049, %v1050
      %v1052 = vsel %vm713, %v998, 0.0
      %v1053 = vadd.f32 %v1051, %v1052
      %v1054 = vsel %vm713, %v999, 0.0
      %v1055 = vadd.f32 %v1053, %v1054
      %v1056 = vsel %vm713, %v1000, 0.0
      %v1057 = vadd.f32 %v1055, %v1056
      %v1058 = vsel %vm713, %v1001, 0.0
      %v1059 = vadd.f32 %v1057, %v1058
      %v1060 = vsel %vm713, %v1002, 0.0
      %v1061 = vadd.f32 %v1059, %v1060
      %v1062 = vsel %vm713, %v1003, 0.0
      %v1063 = vadd.f32 %v1061, %v1062
      %v1064 = vsel %vm713, %v1004, 0.0
      %v1065 = vadd.f32 %v1063, %v1064
      %v1066 = vsel %vm713, %v1005, 0.0
      %v1067 = vadd.f32 %v1065, %v1066
      %v1068 = vsel %vm713, %v1006, 0.0
      %v1069 = vadd.f32 %v1067, %v1068
      %v1070 = vrot.slane %v1069, 4
      %v1071 = vadd.f32 %v1069, %v1070
      %v1072 = vrot.slane %v1071, 2
      %v1073 = vadd.f32 %v1071, %v1072
      %v1074 = vrot.slane %v1073, 1
      %v1075 = vadd.f32 %v1073, %v1074
      %p1076 = scmp.eq.s32.totalorder %s18, 0
      // Predicated region
      $region33: #{resblock_forward.2} parent=31 // pred_check
        %p1077 = pneg %p1076
      $region34: #{resblock_forward.2} parent=31 // pred_check_branch
        %1079 = sbr.rel (%p1077) target = $region36
      $region35: #{resblock_forward.2} parent=31 // pred_region
        %vm1080 = vcmask 57344
        %1081 = vst.msk [vmem:[%s5] sm:$0x1] %vm1080, %v974
        %1082 = vst.msk [vmem:[%s6] sm:$0x1] %vm1080, %v1075
      $region36: #{resblock_forward.2} parent=31 // pred_fallthru
        _
      %p1083 = scmp.ne.s32.totalorder %s18, 0
      // Predicated region
      $region37: #{resblock_forward.2} parent=31 // pred_check
        %p1084 = pneg %p1083
      $region38: #{resblock_forward.2} parent=31 // pred_check_branch
        %1086 = sbr.rel (%p1084) target = $region40
      $region39: #{resblock_forward.2} parent=31 // pred_region
        %v1087 = vld [vmem:[%s5] sm:$0x1]
        %v1088 = vadd.f32 %v1087, %v974
        %vm1089 = vcmask 57344
        %1090 = vst.msk [vmem:[%s5] sm:$0x1] %vm1089, %v1088
        %v1091 = vld [vmem:[%s6] sm:$0x1]
        %v1092 = vadd.f32 %v1091, %v1075
        %1093 = vst.msk [vmem:[%s6] sm:$0x1] %vm1089, %v1092
      $region40: #{resblock_forward.2} parent=31 // pred_fallthru
        _
      %s1094 = smul.u32 32, %s18
      %p1095 = scmp.lt.s32.totalorder %s1094, 63
      %s1096 = scalar_select %p1095, %s1094, 63
      %s1097 = smul.addr %s1096, 8
      %s1098 = scalar_lea.vmem %s3, %s1097
      %s1099 = smul.u32 32, %s18
      %p1100 = scmp.lt.s32.totalorder %s1099, 63
      %s1101 = scalar_select %p1100, %s1099, 63
      %s1102 = smul.addr %s1101, 8
      %s1103 = scalar_lea.vmem %s4, %s1102
      // Predicated region
      $region41: #{resblock_forward.2} parent=31 // pred_check
        %p1104 = pneg %p104
      $region42: #{resblock_forward.2} parent=31 // pred_check_branch
        %1106 = sbr.rel (%p1104) target = $region44
      $region43: #{resblock_forward.2} parent=31 // pred_region
        %s1107 = smul.u32 32, %s18
      $region44: #{resblock_forward.2} parent=31 // pred_fallthru
        _
      // Predicated region
      $region45: #{resblock_forward.2} parent=31 // pred_check
        %p1108 = pneg %p130
      $region46: #{resblock_forward.2} parent=31 // pred_check_branch
        %1110 = sbr.rel (%p1108) target = $region48
      $region47: #{resblock_forward.2} parent=31 // pred_region
        %s1111 = smul.u32 32, %s18
      $region48: #{resblock_forward.2} parent=31 // pred_fallthru
        _
      // Predicated region
      $region49: #{resblock_forward.2} parent=31 // pred_check
        %p1112 = pneg %p151
      $region50: #{resblock_forward.2} parent=31 // pred_check_branch
        %1114 = sbr.rel (%p1112) target = $region52
      $region51: #{resblock_forward.2} parent=31 // pred_region
        _
      $region52: #{resblock_forward.2} parent=31 // pred_fallthru
        _
      // Predicated region
      $region53: #{resblock_forward.2} parent=31 // pred_check
        %p1115 = pneg %p172
      $region54: #{resblock_forward.2} parent=31 // pred_check_branch
        %1117 = sbr.rel (%p1115) target = $region56
      $region55: #{resblock_forward.2} parent=31 // pred_region
        _
      $region56: #{resblock_forward.2} parent=31 // pred_fallthru
        _
      // Predicated region
      $region57: #{resblock_forward.2} parent=31 // pred_check
        %p1118 = pneg %p151
      $region58: #{resblock_forward.2} parent=31 // pred_check_branch
        %1120 = sbr.rel (%p1118) target = $region60
      $region59: #{resblock_forward.2} parent=31 // pred_region
        _
      $region60: #{resblock_forward.2} parent=31 // pred_fallthru
        _
      // Predicated region
      $region61: #{resblock_forward.2} parent=31 // pred_check
        %p1121 = pneg %p172
      $region62: #{resblock_forward.2} parent=31 // pred_check_branch
        %1123 = sbr.rel (%p1121) target = $region64
      $region63: #{resblock_forward.2} parent=31 // pred_region
        _
      $region64: #{resblock_forward.2} parent=31 // pred_fallthru
        _
    $region32: #{resblock_forward.2} parent=5 // pred_fallthru
      _
    %p1124 = scmp.le.s32.totalorder 2, %s13
    // Predicated region
    $region65: #{resblock_forward.2} parent=5 // pred_check
      %p1125 = pneg %p1124
    $region66: #{resblock_forward.2} parent=5 // pred_check_branch
      %1127 = sbr.rel (%p1125) target = $region68
    $region67: #{resblock_forward.2} parent=5 // pred_region
      %s1128 = ssub.s32 %s13, 2
      // Predicated region
      $region69: #{resblock_forward.2} parent=67 // pred_check
        %p1129 = pneg %p110
      $region70: #{resblock_forward.2} parent=67 // pred_check_branch
        %1131 = sbr.rel (%p1129) target = $region72
      $region71: #{resblock_forward.2} parent=67 // pred_region
        %s1132 = smul.u32 32, %s19
        %p1133 = scmp.lt.s32.totalorder %s1132, 63
        %s1134 = scalar_select %p1133, %s1132, 63
        %s1135 = smul.addr %s1134, 8
        %s1136 = scalar_lea.vmem %s3, %s1135
      $region72: #{resblock_forward.2} parent=67 // pred_fallthru
        _
      // Predicated region
      $region73: #{resblock_forward.2} parent=67 // pred_check
        %p1137 = pneg %p136
      $region74: #{resblock_forward.2} parent=67 // pred_check_branch
        %1139 = sbr.rel (%p1137) target = $region76
      $region75: #{resblock_forward.2} parent=67 // pred_region
        %s1140 = smul.u32 32, %s19
        %p1141 = scmp.lt.s32.totalorder %s1140, 63
        %s1142 = scalar_select %p1141, %s1140, 63
        %s1143 = smul.addr %s1142, 8
        %s1144 = scalar_lea.vmem %s4, %s1143
      $region76: #{resblock_forward.2} parent=67 // pred_fallthru
        _
    $region68: #{resblock_forward.2} parent=5 // pred_fallthru
      _
  $region6: #{resblock_forward.2} parent=0 // loop_footer
    %s17 = sadd.s32 1, %s13
  $region7: #{resblock_forward.2} parent=0 // loop_footer_branch
    %12 = sbr.rel target = $region3
  $region8: #{resblock_forward.2} parent=0 // loop_exit
    _

</llo_original>
